<compile_context>
chip_gen: v7x
topology: tpu7x:2x2x1
jax: 0.10.0
libtpu: 0.0.40
codegen_flags: <defaults>
</compile_context>

<pallas_src>
import functools

import numpy as np

import jax
import jax.numpy as jnp
from jax import lax
from jax.experimental import pallas as pl
from jax.experimental.pallas import tpu as pltpu


# --------------------------------------------------------------------------
# In-kernel helpers
# --------------------------------------------------------------------------
def _shift_lanes(x, off):
    """result[..., s] = x[..., s + off] when in range, zero-filled otherwise.

    Implemented with static lane slices + concatenation (unambiguous
    semantics); out-of-range / row-wrap positions are zeroed again by the
    per-tap border masks, so any residual fill value is irrelevant.
    """
    if off == 0:
        return x
    n = x.shape[-1]
    if off > 0:
        fill = jnp.zeros(x.shape[:-1] + (off,), x.dtype)
        return jnp.concatenate([x[..., off:], fill], axis=-1)
    k = -off
    fill = jnp.zeros(x.shape[:-1] + (k,), x.dtype)
    return jnp.concatenate([fill, x[..., :n - k]], axis=-1)


# --------------------------------------------------------------------------
# Kernels
# --------------------------------------------------------------------------
def _lb_s1_kernel(x_ref, w1_ref, b1_ref, wdw_ref, b2_ref, w3_ref, b3_ref,
                  mask_ref, out_ref, *, W, shortcut, compute_dtype, trivial):
    """stride=1 path.  Layout: (Bt, C, S) with S = H*W on the lane axis.

    x_ref   : (Bt, C_in,  S)      input block (original dtype)
    w1_ref  : (C_mid, C_in)       expansion 1x1 weights (BN1 scale folded)
    b1_ref  : (C_mid, 1)          folded BN1 bias
    wdw_ref : (3, 3, C_mid, 1)    depthwise weights (BN2 scale folded)
    b2_ref  : (C_mid, 1)          folded BN2 bias
    w3_ref  : (C_out, C_mid)      projection 1x1 weights (BN3 scale folded)
    b3_ref  : (C_out, 1)          folded BN3 bias
    mask_ref: (9, 1, S)           static border masks per 3x3 tap
    out_ref : (Bt, C_out, S)
    """
    Bt, C_in, S = x_ref.shape
    C_mid = w1_ref.shape[0]
    C_out = w3_ref.shape[0]

    x = x_ref[...]

    # ---- 1x1 expansion conv + BN1 + ReLU (MXU, lane-dense pixel axis) ----
    w1 = jnp.broadcast_to(w1_ref[...], (Bt, C_mid, C_in))
    y1 = jnp.einsum('bmc,bcs->bms', w1, x.astype(compute_dtype),
                    preferred_element_type=jnp.float32)
    y1 = jnp.maximum(y1 + b1_ref[...], 0.0)                 # (Bt, C_mid, S)

    # ---- 3x3 depthwise conv + BN2 + ReLU: 9 lane-shifted masked FMAs ----
    acc = None
    for dy in range(3):
        for dx in range(3):
            t = dy * 3 + dx
            off = (dy - 1) * W + (dx - 1)
            wtap = wdw_ref[dy, dx]                          # (C_mid, 1)
            if not trivial[t]:
                wtap = wtap * mask_ref[t]                   # (C_mid, S)
            term = _shift_lanes(y1, off) * wtap
            acc = term if acc is None else acc + term
    y2 = jnp.maximum(acc + b2_ref[...], 0.0)

    # ---- 1x1 projection conv + BN3 (no ReLU) + optional residual (MXU) ----
    w3 = jnp.broadcast_to(w3_ref[...], (Bt, C_out, C_mid))
    z = jnp.einsum('boc,bcs->bos', w3, y2.astype(compute_dtype),
                   preferred_element_type=jnp.float32)
    z = z + b3_ref[...]
    if shortcut:
        z = z + x.astype(z.dtype)
    out_ref[...] = z.astype(out_ref.dtype)


def _lb_s2_kernel(xp_ref, w1_ref, b1_ref, wdw_ref, b2_ref, w3_ref, b3_ref,
                  mask_ref, out_ref, *, Wo, compute_dtype, trivial):
    """stride=2 path (no shortcut possible).

    xp_ref : (Bt, 4, C_in, So)   4 input parity planes (p = 2*rowpar + colpar),
                                 So = (H/2)*(W/2) flattened on the lane axis.
    Each 3x3 tap at stride 2 reads exactly one parity plane shifted by
    {-1, 0} rows/cols in the downsampled grid.
    """
    Bt = xp_ref.shape[0]
    So = xp_ref.shape[3]
    C_mid = w1_ref.shape[0]
    C_in = w1_ref.shape[1]
    C_out = w3_ref.shape[0]

    # ---- 1x1 expansion conv + BN1 + ReLU per parity plane (MXU) ----
    w1 = jnp.broadcast_to(w1_ref[...], (Bt, C_mid, C_in))
    b1 = b1_ref[...]
    y1 = []
    for p in range(4):
        xq = xp_ref[:, p, :, :].astype(compute_dtype)       # (Bt, C_in, So)
        yq = jnp.einsum('bmc,bcs->bms', w1, xq,
                        preferred_element_type=jnp.float32)
        y1.append(jnp.maximum(yq + b1, 0.0))                # (Bt, C_mid, So)

    # ---- 3x3 depthwise conv, stride 2 + BN2 + ReLU ----
    acc = None
    for dy in range(3):
        for dx in range(3):
            t = dy * 3 + dx
            pr = 0 if dy == 1 else 1                        # source row parity
            pc = 0 if dx == 1 else 1                        # source col parity
            off = (-Wo if dy == 0 else 0) + (-1 if dx == 0 else 0)
            wtap = wdw_ref[dy, dx]                          # (C_mid, 1)
            if not trivial[t]:
                wtap = wtap * mask_ref[t]                   # (C_mid, So)
            term = _shift_lanes(y1[2 * pr + pc], off) * wtap
            acc = term if acc is None else acc + term
    y2 = jnp.maximum(acc + b2_ref[...], 0.0)

    # ---- 1x1 projection conv + BN3 (no ReLU) (MXU) ----
    w3 = jnp.broadcast_to(w3_ref[...], (Bt, C_out, C_mid))
    z = jnp.einsum('boc,bcs->bos', w3, y2.astype(compute_dtype),
                   preferred_element_type=jnp.float32) + b3_ref[...]
    out_ref[...] = z.astype(out_ref.dtype)


# --------------------------------------------------------------------------
# Wrapper
# --------------------------------------------------------------------------
def _pad_to(n, m):
    return ((n + m - 1) // m) * m


def _block_vmem_bytes(bt, planes, c_in, c_mid, c_out, s):
    """Rough per-grid-step VMEM bytes: (8,128) layout padding + the 2x double
    buffering Pallas applies to pipelined input/output blocks + temporaries."""
    lanes = _pad_to(s, 128)
    cin, cmid, cout = _pad_to(c_in, 8), _pad_to(c_mid, 8), _pad_to(c_out, 8)
    in_b = 2 * bt * planes * cin * lanes * 4            # input block (x2 dbuf)
    out_b = 2 * bt * cout * lanes * 4                   # output block (x2 dbuf)
    tmp_b = bt * (planes + 5) * cmid * lanes * 4        # y1 planes + tap temps + acc + y2
    return in_b + out_b + tmp_b


def linear_bottleneck_forward(x_nchw, params, *, stride=2,
                              compute_dtype=jnp.bfloat16, batch_block=None):
    """_LinearBottleneck forward.  x_nchw: (N, C_in, H, W).  Returns NCHW."""
    (w1, g1, be1, m1, v1,
     wdw, g2, be2, m2, v2,
     w3, g3, be3, m3, v3, eps) = params

    N, C_in, H, W = x_nchw.shape
    C_mid = w1.shape[0]
    C_out = w3.shape[0]
    shortcut = (stride == 1 and C_in == C_out)

    # ---- fold eval-mode BatchNorms into conv weights / per-channel biases ----
    s1 = g1 / jnp.sqrt(v1 + eps)
    s2 = g2 / jnp.sqrt(v2 + eps)
    s3 = g3 / jnp.sqrt(v3 + eps)
    b1 = (be1 - m1 * s1).reshape(C_mid, 1).astype(jnp.float32)
    b2 = (be2 - m2 * s2).reshape(C_mid, 1).astype(jnp.float32)
    b3 = (be3 - m3 * s3).reshape(C_out, 1).astype(jnp.float32)
    w1f = (w1[:, :, 0, 0] * s1[:, None]).astype(compute_dtype)            # (C_mid, C_in)
    wdwf = ((jnp.transpose(wdw[:, 0], (1, 2, 0)) * s2)[..., None]
            ).astype(jnp.float32)                                         # (3, 3, C_mid, 1)
    w3f = (w3[:, :, 0, 0] * s3[:, None]).astype(compute_dtype)            # (C_out, C_mid)

    if stride == 1:
        Ho, Wo, planes = H, W, 1
    elif stride == 2:
        if H % 2 or W % 2:
            # TODO(synk): stride=2 with odd spatial dims needs a ragged edge path.
            raise NotImplementedError("stride=2 path assumes even H and W")
        Ho, Wo, planes = H // 2, W // 2, 4
    else:
        raise NotImplementedError("stride must be 1 or 2")
    So = Ho * Wo

    # ---- static border masks for the 9 depthwise taps (lane axis = flat HW) --
    ii = np.arange(So) // Wo
    jj = np.arange(So) % Wo
    masks_np = np.zeros((9, 1, So), np.float32)
    trivial = []
    for dy in range(3):
        for dx in range(3):
            if stride == 1:
                ok = ((ii + dy - 1 >= 0) & (ii + dy - 1 < H)
                      & (jj + dx - 1 >= 0) & (jj + dx - 1 < W))
            else:
                ok = np.ones(So, bool)
                if dy == 0:
                    ok &= ii >= 1
                if dx == 0:
                    ok &= jj >= 1
            masks_np[dy * 3 + dx, 0] = ok
            trivial.append(bool(ok.all()))
    masks = jnp.asarray(masks_np)

    # ---- VMEM-aware batch tile; >=2-step clamp only for 2-TC (v7x) chips ----
    try:
        phys_vmem = int(pltpu.get_tpu_info().vmem_capacity_bytes)
    except Exception:                                    # pragma: no cover
        phys_vmem = 64 * 1024 * 1024                     # conservative (v7x)
    try:
        kind = jax.devices()[0].device_kind.lower()
    except Exception:                                    # pragma: no cover
        kind = ""
    two_tc = "v7" in kind

    vmem_limit = max(32 * 1024 * 1024,
                     min(int(phys_vmem * 0.75), 100 * 1024 * 1024))
    if batch_block is None:
        budget = int(vmem_limit * 0.8)
        per_img = _block_vmem_bytes(1, planes, C_in, C_mid, C_out, So)
        batch_block = max(1, min(N, budget // max(per_img, 1)))
        if two_tc and N >= 2:
            batch_block = min(batch_block, pl.cdiv(N, 2))
    Bt = int(batch_block)
    grid = (pl.cdiv(N, Bt),)
    vmem_limit = min(max(vmem_limit,
                         int(_block_vmem_bytes(Bt, planes, C_in, C_mid,
                                               C_out, So) * 1.5)),
                     int(phys_vmem * 0.9))

    cparams = pltpu.CompilerParams(dimension_semantics=("parallel",),
                                   vmem_limit_bytes=int(vmem_limit))

    wspecs = [
        pl.BlockSpec((C_mid, C_in), lambda n: (0, 0)),
        pl.BlockSpec((C_mid, 1), lambda n: (0, 0)),
        pl.BlockSpec((3, 3, C_mid, 1), lambda n: (0, 0, 0, 0)),
        pl.BlockSpec((C_mid, 1), lambda n: (0, 0)),
        pl.BlockSpec((C_out, C_mid), lambda n: (0, 0)),
        pl.BlockSpec((C_out, 1), lambda n: (0, 0)),
        pl.BlockSpec((9, 1, So), lambda n: (0, 0, 0)),
    ]
    out_spec = pl.BlockSpec((Bt, C_out, So), lambda n: (n, 0, 0))
    out_shape = jax.ShapeDtypeStruct((N, C_out, So), x_nchw.dtype)

    if stride == 1:
        xs = x_nchw.reshape(N, C_in, So)        # free reshape (NCHW stays NCHW)
        kernel = functools.partial(_lb_s1_kernel, W=W, shortcut=shortcut,
                                   compute_dtype=compute_dtype,
                                   trivial=tuple(trivial))
        in_specs = [pl.BlockSpec((Bt, C_in, So), lambda n: (n, 0, 0))] + wspecs
        args = (xs,)
    else:
        # Parity repack of the (small, C_in-channel) input: one XLA pass.
        # The C_mid intermediates never touch HBM.
        xp = x_nchw.reshape(N, C_in, Ho, 2, Wo, 2)
        xp = jnp.transpose(xp, (0, 3, 5, 1, 2, 4)).reshape(N, 4, C_in, So)
        kernel = functools.partial(_lb_s2_kernel, Wo=Wo,
                                   compute_dtype=compute_dtype,
                                   trivial=tuple(trivial))
        in_specs = [pl.BlockSpec((Bt, 4, C_in, So),
                                 lambda n: (n, 0, 0, 0))] + wspecs
        args = (xp,)

    out = pl.pallas_call(
        kernel,
        out_shape=out_shape,
        grid_spec=pltpu.PrefetchScalarGridSpec(
            num_scalar_prefetch=0,
            grid=grid,
            in_specs=in_specs,
            out_specs=out_spec),
        compiler_params=cparams,
    )(*args, w1f, b1, wdwf, b2, w3f, b3, masks)

    return out.reshape(N, C_out, Ho, Wo)        # free reshape back to NCHW


# --------------------------------------------------------------------------
# Pure-JAX reference + synthetic params + self-test
# --------------------------------------------------------------------------
def _reference(x_nchw, params, *, stride=2):
    (w1, g1, be1, m1, v1,
     wdw, g2, be2, m2, v2,
     w3, g3, be3, m3, v3, eps) = params
    C_mid = w1.shape[0]
    C_in = x_nchw.shape[1]
    C_out = w3.shape[0]
    shortcut = (stride == 1 and C_in == C_out)
    hi = lax.Precision.HIGHEST
    x = jnp.transpose(x_nchw, (0, 2, 3, 1))
    y = lax.conv_general_dilated(x, jnp.transpose(w1, (2, 3, 1, 0)), (1, 1),
                                 ((0, 0), (0, 0)),
                                 dimension_numbers=("NHWC", "HWIO", "NHWC"),
                                 precision=hi)
    y = (y - m1) / jnp.sqrt(v1 + eps) * g1 + be1
    y = jnp.maximum(y, 0.0)
    y = lax.conv_general_dilated(y, jnp.transpose(wdw, (2, 3, 1, 0)),
                                 (stride, stride), ((1, 1), (1, 1)),
                                 dimension_numbers=("NHWC", "HWIO", "NHWC"),
                                 feature_group_count=C_mid, precision=hi)
    y = (y - m2) / jnp.sqrt(v2 + eps) * g2 + be2
    y = jnp.maximum(y, 0.0)
    z = lax.conv_general_dilated(y, jnp.transpose(w3, (2, 3, 1, 0)), (1, 1),
                                 ((0, 0), (0, 0)),
                                 dimension_numbers=("NHWC", "HWIO", "NHWC"),
                                 precision=hi)
    z = (z - m3) / jnp.sqrt(v3 + eps) * g3 + be3
    z = jnp.transpose(z, (0, 3, 1, 2))
    if shortcut:
        z = z + x_nchw
    return z


def _init_params(key, C_in, C_out, expansion=6):
    C_mid = C_in * expansion
    k = jax.random.split(key, 15)
    w1 = jax.random.normal(k[0], (C_mid, C_in, 1, 1), jnp.float32) * 0.3
    g1 = jax.random.uniform(k[1], (C_mid,), jnp.float32, 0.5, 1.5)
    be1 = jax.random.normal(k[2], (C_mid,), jnp.float32) * 0.1
    m1 = jax.random.normal(k[3], (C_mid,), jnp.float32) * 0.05
    v1 = jax.random.uniform(k[4], (C_mid,), jnp.float32, 0.5, 1.5)
    wdw = jax.random.normal(k[5], (C_mid, 1, 3, 3), jnp.float32) * 0.3
    g2 = jax.random.uniform(k[6], (C_mid,), jnp.float32, 0.5, 1.5)
    be2 = jax.random.normal(k[7], (C_mid,), jnp.float32) * 0.1
    m2 = jax.random.normal(k[8], (C_mid,), jnp.float32) * 0.05
    v2 = jax.random.uniform(k[9], (C_mid,), jnp.float32, 0.5, 1.5)
    w3 = jax.random.normal(k[10], (C_out, C_mid, 1, 1), jnp.float32) * 0.3
    g3 = jax.random.uniform(k[11], (C_out,), jnp.float32, 0.5, 1.5)
    be3 = jax.random.normal(k[12], (C_out,), jnp.float32) * 0.1
    m3 = jax.random.normal(k[13], (C_out,), jnp.float32) * 0.05
    v3 = jax.random.uniform(k[14], (C_out,), jnp.float32, 0.5, 1.5)
    eps = 1e-5
    return (w1, g1, be1, m1, v1, wdw, g2, be2, m2, v2,
            w3, g3, be3, m3, v3, eps)


if __name__ == "__main__":
    key = jax.random.PRNGKey(0)
    kx1, kp1, kx2, kp2 = jax.random.split(key, 4)

    # Config 1: default _LinearBottleneck(4, 8) -> expansion=6, stride=2.
    N, C_in, C_out, H, W = 2, 4, 8, 16, 16
    x1 = jax.random.normal(kx1, (N, C_in, H, W), jnp.float32)
    p1 = _init_params(kp1, C_in, C_out, expansion=6)
    ref1 = jax.block_until_ready(_reference(x1, p1, stride=2))

    out1 = jax.block_until_ready(
        linear_bottleneck_forward(x1, p1, stride=2, compute_dtype=jnp.float32))
    assert out1.shape == (N, C_out, H // 2, W // 2), out1.shape
    assert jnp.allclose(out1, ref1, atol=1e-4, rtol=1e-4), float(
        jnp.max(jnp.abs(out1 - ref1)))

    # Config 2: stride=1, in==out -> exercises the residual shortcut path.
    C2 = 4
    x2 = jax.random.normal(kx2, (N, C2, H, W), jnp.float32)
    p2 = _init_params(kp2, C2, C2, expansion=6)
    ref2 = jax.block_until_ready(_reference(x2, p2, stride=1))

    out2 = jax.block_until_ready(
        linear_bottleneck_forward(x2, p2, stride=1, compute_dtype=jnp.float32))
    assert out2.shape == (N, C2, H, W), out2.shape
    assert jnp.allclose(out2, ref2, atol=1e-4, rtol=1e-4), float(
        jnp.max(jnp.abs(out2 - ref2)))

    # Default (bf16 MXU inputs, f32 accumulation) perf path: relative-L2 check.
    out1b = jax.block_until_ready(linear_bottleneck_forward(x1, p1, stride=2))
    rel1 = float(jnp.linalg.norm(out1b - ref1) / jnp.linalg.norm(ref1))
    assert rel1 < 3e-2, rel1
    out2b = jax.block_until_ready(linear_bottleneck_forward(x2, p2, stride=1))
    rel2 = float(jnp.linalg.norm(out2b - ref2) / jnp.linalg.norm(ref2))
    assert rel2 < 3e-2, rel2

    print("KERNEL_OK")
</pallas_src>

<mosaic_0001>
module attributes {stable_mosaic.version = 11 : i64} {
  func.func @_lb_s2_kernel(%arg0: i32, %arg1: memref<2x4x4x64xf32, #tpu.memory_space<vmem>>, %arg2: memref<24x4xf32, #tpu.memory_space<vmem>>, %arg3: memref<24x1xf32, #tpu.memory_space<vmem>>, %arg4: memref<3x3x24x1xf32, #tpu.memory_space<vmem>>, %arg5: memref<24x1xf32, #tpu.memory_space<vmem>>, %arg6: memref<8x24xf32, #tpu.memory_space<vmem>>, %arg7: memref<8x1xf32, #tpu.memory_space<vmem>>, %arg8: memref<9x1x64xf32, #tpu.memory_space<vmem>>, %arg9: memref<2x8x64xf32, #tpu.memory_space<vmem>>) attributes {dimension_semantics = [#tpu.dimension_semantics<parallel>], iteration_bounds = array<i64: 1>, scalar_prefetch = 0 : i64, scratch_operands = 0 : i64, tpu.core_type = #tpu.core_type<tc>, window_params = [{transform_indices = @transform_0, window_bounds = array<i64: 2, 4, 4, 64>}, {pipeline_mode = #tpu.pipeline_mode<synchronous>, transform_indices = @transform_1, window_bounds = array<i64: 24, 4>}, {pipeline_mode = #tpu.pipeline_mode<synchronous>, transform_indices = @transform_2, window_bounds = array<i64: 24, 1>}, {pipeline_mode = #tpu.pipeline_mode<synchronous>, transform_indices = @transform_3, window_bounds = array<i64: 3, 3, 24, 1>}, {pipeline_mode = #tpu.pipeline_mode<synchronous>, transform_indices = @transform_4, window_bounds = array<i64: 24, 1>}, {pipeline_mode = #tpu.pipeline_mode<synchronous>, transform_indices = @transform_5, window_bounds = array<i64: 8, 24>}, {pipeline_mode = #tpu.pipeline_mode<synchronous>, transform_indices = @transform_6, window_bounds = array<i64: 8, 1>}, {pipeline_mode = #tpu.pipeline_mode<synchronous>, transform_indices = @transform_7, window_bounds = array<i64: 9, 1, 64>}, {transform_indices = @transform_8, window_bounds = array<i64: 2, 8, 64>}]} {
    %c0 = arith.constant 0 : index
    %c0_0 = arith.constant 0 : index
    %0 = vector.load %arg2[%c0, %c0_0] : memref<24x4xf32, #tpu.memory_space<vmem>>, vector<24x4xf32>
    %1 = vector.shape_cast %0 : vector<24x4xf32> to vector<1x24x4xf32>
    %2 = vector.broadcast %1 : vector<1x24x4xf32> to vector<2x24x4xf32>
    %c0_1 = arith.constant 0 : index
    %c0_2 = arith.constant 0 : index
    %3 = vector.load %arg3[%c0_1, %c0_2] : memref<24x1xf32, #tpu.memory_space<vmem>>, vector<24x1xf32>
    %c0_3 = arith.constant 0 : index
    %c0_4 = arith.constant 0 : index
    %c0_5 = arith.constant 0 : index
    %c0_6 = arith.constant 0 : index
    %4 = vector.load %arg1[%c0_3, %c0_4, %c0_5, %c0_6] : memref<2x4x4x64xf32, #tpu.memory_space<vmem>>, vector<2x1x4x64xf32>
    %5 = vector.shape_cast %4 : vector<2x1x4x64xf32> to vector<2x4x64xf32>
    "tpu.trace_start"() <{level = 10 : i32, message = "bmc,bcs->bms"}> : () -> ()
    %cst = arith.constant dense<0.000000e+00> : vector<2x24x64xf32>
    %6 = tpu.matmul %2, %5, %cst {dimension_numbers = #tpu.dot_dimension_numbers<[2], [1], [1], [2], [0, 0, 0, 1, 1, 2], [0], [0]>} : vector<2x24x4xf32>, vector<2x4x64xf32>, vector<2x24x64xf32> -> vector<2x24x64xf32>
    "tpu.trace_stop"() : () -> ()
    %7 = vector.shape_cast %3 : vector<24x1xf32> to vector<1x24x1xf32>
    %8 = vector.broadcast %7 : vector<1x24x1xf32> to vector<2x24x64xf32>
    %9 = arith.addf %6, %8 : vector<2x24x64xf32>
    %cst_7 = arith.constant 0.000000e+00 : f32
    %10 = vector.broadcast %cst_7 : f32 to vector<2x24x64xf32>
    %11 = arith.maximumf %9, %10 : vector<2x24x64xf32>
    %c0_8 = arith.constant 0 : index
    %c1 = arith.constant 1 : index
    %c0_9 = arith.constant 0 : index
    %c0_10 = arith.constant 0 : index
    %12 = vector.load %arg1[%c0_8, %c1, %c0_9, %c0_10] : memref<2x4x4x64xf32, #tpu.memory_space<vmem>>, vector<2x1x4x64xf32>
    %13 = vector.shape_cast %12 : vector<2x1x4x64xf32> to vector<2x4x64xf32>
    "tpu.trace_start"() <{level = 10 : i32, message = "bmc,bcs->bms"}> : () -> ()
    %cst_11 = arith.constant dense<0.000000e+00> : vector<2x24x64xf32>
    %14 = tpu.matmul %2, %13, %cst_11 {dimension_numbers = #tpu.dot_dimension_numbers<[2], [1], [1], [2], [0, 0, 0, 1, 1, 2], [0], [0]>} : vector<2x24x4xf32>, vector<2x4x64xf32>, vector<2x24x64xf32> -> vector<2x24x64xf32>
    "tpu.trace_stop"() : () -> ()
    %15 = vector.shape_cast %3 : vector<24x1xf32> to vector<1x24x1xf32>
    %16 = vector.broadcast %15 : vector<1x24x1xf32> to vector<2x24x64xf32>
    %17 = arith.addf %14, %16 : vector<2x24x64xf32>
    %cst_12 = arith.constant 0.000000e+00 : f32
    %18 = vector.broadcast %cst_12 : f32 to vector<2x24x64xf32>
    %19 = arith.maximumf %17, %18 : vector<2x24x64xf32>
    %c0_13 = arith.constant 0 : index
    %c2 = arith.constant 2 : index
    %c0_14 = arith.constant 0 : index
    %c0_15 = arith.constant 0 : index
    %20 = vector.load %arg1[%c0_13, %c2, %c0_14, %c0_15] : memref<2x4x4x64xf32, #tpu.memory_space<vmem>>, vector<2x1x4x64xf32>
    %21 = vector.shape_cast %20 : vector<2x1x4x64xf32> to vector<2x4x64xf32>
    "tpu.trace_start"() <{level = 10 : i32, message = "bmc,bcs->bms"}> : () -> ()
    %cst_16 = arith.constant dense<0.000000e+00> : vector<2x24x64xf32>
    %22 = tpu.matmul %2, %21, %cst_16 {dimension_numbers = #tpu.dot_dimension_numbers<[2], [1], [1], [2], [0, 0, 0, 1, 1, 2], [0], [0]>} : vector<2x24x4xf32>, vector<2x4x64xf32>, vector<2x24x64xf32> -> vector<2x24x64xf32>
    "tpu.trace_stop"() : () -> ()
    %23 = vector.shape_cast %3 : vector<24x1xf32> to vector<1x24x1xf32>
    %24 = vector.broadcast %23 : vector<1x24x1xf32> to vector<2x24x64xf32>
    %25 = arith.addf %22, %24 : vector<2x24x64xf32>
    %cst_17 = arith.constant 0.000000e+00 : f32
    %26 = vector.broadcast %cst_17 : f32 to vector<2x24x64xf32>
    %27 = arith.maximumf %25, %26 : vector<2x24x64xf32>
    %c0_18 = arith.constant 0 : index
    %c3 = arith.constant 3 : index
    %c0_19 = arith.constant 0 : index
    %c0_20 = arith.constant 0 : index
    %28 = vector.load %arg1[%c0_18, %c3, %c0_19, %c0_20] : memref<2x4x4x64xf32, #tpu.memory_space<vmem>>, vector<2x1x4x64xf32>
    %29 = vector.shape_cast %28 : vector<2x1x4x64xf32> to vector<2x4x64xf32>
    "tpu.trace_start"() <{level = 10 : i32, message = "bmc,bcs->bms"}> : () -> ()
    %cst_21 = arith.constant dense<0.000000e+00> : vector<2x24x64xf32>
    %30 = tpu.matmul %2, %29, %cst_21 {dimension_numbers = #tpu.dot_dimension_numbers<[2], [1], [1], [2], [0, 0, 0, 1, 1, 2], [0], [0]>} : vector<2x24x4xf32>, vector<2x4x64xf32>, vector<2x24x64xf32> -> vector<2x24x64xf32>
    "tpu.trace_stop"() : () -> ()
    %31 = vector.shape_cast %3 : vector<24x1xf32> to vector<1x24x1xf32>
    %32 = vector.broadcast %31 : vector<1x24x1xf32> to vector<2x24x64xf32>
    %33 = arith.addf %30, %32 : vector<2x24x64xf32>
    %cst_22 = arith.constant 0.000000e+00 : f32
    %34 = vector.broadcast %cst_22 : f32 to vector<2x24x64xf32>
    %35 = arith.maximumf %33, %34 : vector<2x24x64xf32>
    %c0_23 = arith.constant 0 : index
    %c0_24 = arith.constant 0 : index
    %c0_25 = arith.constant 0 : index
    %c0_26 = arith.constant 0 : index
    %36 = vector.load %arg4[%c0_23, %c0_24, %c0_25, %c0_26] : memref<3x3x24x1xf32, #tpu.memory_space<vmem>>, vector<1x1x24x1xf32>
    %37 = vector.shape_cast %36 : vector<1x1x24x1xf32> to vector<24x1xf32>
    %c0_27 = arith.constant 0 : index
    %c0_28 = arith.constant 0 : index
    %c0_29 = arith.constant 0 : index
    %38 = vector.load %arg8[%c0_27, %c0_28, %c0_29] : memref<9x1x64xf32, #tpu.memory_space<vmem>>, vector<1x1x64xf32>
    %39 = vector.shape_cast %38 : vector<1x1x64xf32> to vector<1x64xf32>
    %40 = vector.broadcast %37 : vector<24x1xf32> to vector<24x64xf32>
    %41 = vector.broadcast %39 : vector<1x64xf32> to vector<24x64xf32>
    %42 = arith.mulf %40, %41 : vector<24x64xf32>
    %cst_30 = arith.constant 0.000000e+00 : f32
    %43 = vector.broadcast %cst_30 : f32 to vector<2x24x9xf32>
    %44 = vector.extract_strided_slice %35 {offsets = [0, 0, 0], sizes = [2, 24, 55], strides = [1, 1, 1]} : vector<2x24x64xf32> to vector<2x24x55xf32>
    %45 = tpu.concatenate %43, %44 in 2 : vector<2x24x9xf32>, vector<2x24x55xf32> -> vector<2x24x64xf32>
    %46 = vector.shape_cast %42 : vector<24x64xf32> to vector<1x24x64xf32>
    %47 = vector.broadcast %46 : vector<1x24x64xf32> to vector<2x24x64xf32>
    %48 = arith.mulf %45, %47 : vector<2x24x64xf32>
    %c0_31 = arith.constant 0 : index
    %c1_32 = arith.constant 1 : index
    %c0_33 = arith.constant 0 : index
    %c0_34 = arith.constant 0 : index
    %49 = vector.load %arg4[%c0_31, %c1_32, %c0_33, %c0_34] : memref<3x3x24x1xf32, #tpu.memory_space<vmem>>, vector<1x1x24x1xf32>
    %50 = vector.shape_cast %49 : vector<1x1x24x1xf32> to vector<24x1xf32>
    %c1_35 = arith.constant 1 : index
    %c0_36 = arith.constant 0 : index
    %c0_37 = arith.constant 0 : index
    %51 = vector.load %arg8[%c1_35, %c0_36, %c0_37] : memref<9x1x64xf32, #tpu.memory_space<vmem>>, vector<1x1x64xf32>
    %52 = vector.shape_cast %51 : vector<1x1x64xf32> to vector<1x64xf32>
    %53 = vector.broadcast %50 : vector<24x1xf32> to vector<24x64xf32>
    %54 = vector.broadcast %52 : vector<1x64xf32> to vector<24x64xf32>
    %55 = arith.mulf %53, %54 : vector<24x64xf32>
    %cst_38 = arith.constant 0.000000e+00 : f32
    %56 = vector.broadcast %cst_38 : f32 to vector<2x24x8xf32>
    %57 = vector.extract_strided_slice %27 {offsets = [0, 0, 0], sizes = [2, 24, 56], strides = [1, 1, 1]} : vector<2x24x64xf32> to vector<2x24x56xf32>
    %58 = tpu.concatenate %56, %57 in 2 : vector<2x24x8xf32>, vector<2x24x56xf32> -> vector<2x24x64xf32>
    %59 = vector.shape_cast %55 : vector<24x64xf32> to vector<1x24x64xf32>
    %60 = vector.broadcast %59 : vector<1x24x64xf32> to vector<2x24x64xf32>
    %61 = arith.mulf %58, %60 : vector<2x24x64xf32>
    %62 = arith.addf %48, %61 : vector<2x24x64xf32>
    %c0_39 = arith.constant 0 : index
    %c2_40 = arith.constant 2 : index
    %c0_41 = arith.constant 0 : index
    %c0_42 = arith.constant 0 : index
    %63 = vector.load %arg4[%c0_39, %c2_40, %c0_41, %c0_42] : memref<3x3x24x1xf32, #tpu.memory_space<vmem>>, vector<1x1x24x1xf32>
    %64 = vector.shape_cast %63 : vector<1x1x24x1xf32> to vector<24x1xf32>
    %c2_43 = arith.constant 2 : index
    %c0_44 = arith.constant 0 : index
    %c0_45 = arith.constant 0 : index
    %65 = vector.load %arg8[%c2_43, %c0_44, %c0_45] : memref<9x1x64xf32, #tpu.memory_space<vmem>>, vector<1x1x64xf32>
    %66 = vector.shape_cast %65 : vector<1x1x64xf32> to vector<1x64xf32>
    %67 = vector.broadcast %64 : vector<24x1xf32> to vector<24x64xf32>
    %68 = vector.broadcast %66 : vector<1x64xf32> to vector<24x64xf32>
    %69 = arith.mulf %67, %68 : vector<24x64xf32>
    %cst_46 = arith.constant 0.000000e+00 : f32
    %70 = vector.broadcast %cst_46 : f32 to vector<2x24x8xf32>
    %71 = vector.extract_strided_slice %35 {offsets = [0, 0, 0], sizes = [2, 24, 56], strides = [1, 1, 1]} : vector<2x24x64xf32> to vector<2x24x56xf32>
    %72 = tpu.concatenate %70, %71 in 2 : vector<2x24x8xf32>, vector<2x24x56xf32> -> vector<2x24x64xf32>
    %73 = vector.shape_cast %69 : vector<24x64xf32> to vector<1x24x64xf32>
    %74 = vector.broadcast %73 : vector<1x24x64xf32> to vector<2x24x64xf32>
    %75 = arith.mulf %72, %74 : vector<2x24x64xf32>
    %76 = arith.addf %62, %75 : vector<2x24x64xf32>
    %c1_47 = arith.constant 1 : index
    %c0_48 = arith.constant 0 : index
    %c0_49 = arith.constant 0 : index
    %c0_50 = arith.constant 0 : index
    %77 = vector.load %arg4[%c1_47, %c0_48, %c0_49, %c0_50] : memref<3x3x24x1xf32, #tpu.memory_space<vmem>>, vector<1x1x24x1xf32>
    %78 = vector.shape_cast %77 : vector<1x1x24x1xf32> to vector<24x1xf32>
    %c3_51 = arith.constant 3 : index
    %c0_52 = arith.constant 0 : index
    %c0_53 = arith.constant 0 : index
    %79 = vector.load %arg8[%c3_51, %c0_52, %c0_53] : memref<9x1x64xf32, #tpu.memory_space<vmem>>, vector<1x1x64xf32>
    %80 = vector.shape_cast %79 : vector<1x1x64xf32> to vector<1x64xf32>
    %81 = vector.broadcast %78 : vector<24x1xf32> to vector<24x64xf32>
    %82 = vector.broadcast %80 : vector<1x64xf32> to vector<24x64xf32>
    %83 = arith.mulf %81, %82 : vector<24x64xf32>
    %cst_54 = arith.constant 0.000000e+00 : f32
    %84 = vector.broadcast %cst_54 : f32 to vector<2x24x1xf32>
    %85 = vector.extract_strided_slice %19 {offsets = [0, 0, 0], sizes = [2, 24, 63], strides = [1, 1, 1]} : vector<2x24x64xf32> to vector<2x24x63xf32>
    %86 = tpu.concatenate %84, %85 in 2 : vector<2x24x1xf32>, vector<2x24x63xf32> -> vector<2x24x64xf32>
    %87 = vector.shape_cast %83 : vector<24x64xf32> to vector<1x24x64xf32>
    %88 = vector.broadcast %87 : vector<1x24x64xf32> to vector<2x24x64xf32>
    %89 = arith.mulf %86, %88 : vector<2x24x64xf32>
    %90 = arith.addf %76, %89 : vector<2x24x64xf32>
    %c1_55 = arith.constant 1 : index
    %c1_56 = arith.constant 1 : index
    %c0_57 = arith.constant 0 : index
    %c0_58 = arith.constant 0 : index
    %91 = vector.load %arg4[%c1_55, %c1_56, %c0_57, %c0_58] : memref<3x3x24x1xf32, #tpu.memory_space<vmem>>, vector<1x1x24x1xf32>
    %92 = vector.shape_cast %91 : vector<1x1x24x1xf32> to vector<24x1xf32>
    %93 = vector.shape_cast %92 : vector<24x1xf32> to vector<1x24x1xf32>
    %94 = vector.broadcast %93 : vector<1x24x1xf32> to vector<2x24x64xf32>
    %95 = arith.mulf %11, %94 : vector<2x24x64xf32>
    %96 = arith.addf %90, %95 : vector<2x24x64xf32>
    %c1_59 = arith.constant 1 : index
    %c2_60 = arith.constant 2 : index
    %c0_61 = arith.constant 0 : index
    %c0_62 = arith.constant 0 : index
    %97 = vector.load %arg4[%c1_59, %c2_60, %c0_61, %c0_62] : memref<3x3x24x1xf32, #tpu.memory_space<vmem>>, vector<1x1x24x1xf32>
    %98 = vector.shape_cast %97 : vector<1x1x24x1xf32> to vector<24x1xf32>
    %99 = vector.shape_cast %98 : vector<24x1xf32> to vector<1x24x1xf32>
    %100 = vector.broadcast %99 : vector<1x24x1xf32> to vector<2x24x64xf32>
    %101 = arith.mulf %19, %100 : vector<2x24x64xf32>
    %102 = arith.addf %96, %101 : vector<2x24x64xf32>
    %c2_63 = arith.constant 2 : index
    %c0_64 = arith.constant 0 : index
    %c0_65 = arith.constant 0 : index
    %c0_66 = arith.constant 0 : index
    %103 = vector.load %arg4[%c2_63, %c0_64, %c0_65, %c0_66] : memref<3x3x24x1xf32, #tpu.memory_space<vmem>>, vector<1x1x24x1xf32>
    %104 = vector.shape_cast %103 : vector<1x1x24x1xf32> to vector<24x1xf32>
    %c6 = arith.constant 6 : index
    %c0_67 = arith.constant 0 : index
    %c0_68 = arith.constant 0 : index
    %105 = vector.load %arg8[%c6, %c0_67, %c0_68] : memref<9x1x64xf32, #tpu.memory_space<vmem>>, vector<1x1x64xf32>
    %106 = vector.shape_cast %105 : vector<1x1x64xf32> to vector<1x64xf32>
    %107 = vector.broadcast %104 : vector<24x1xf32> to vector<24x64xf32>
    %108 = vector.broadcast %106 : vector<1x64xf32> to vector<24x64xf32>
    %109 = arith.mulf %107, %108 : vector<24x64xf32>
    %cst_69 = arith.constant 0.000000e+00 : f32
    %110 = vector.broadcast %cst_69 : f32 to vector<2x24x1xf32>
    %111 = vector.extract_strided_slice %35 {offsets = [0, 0, 0], sizes = [2, 24, 63], strides = [1, 1, 1]} : vector<2x24x64xf32> to vector<2x24x63xf32>
    %112 = tpu.concatenate %110, %111 in 2 : vector<2x24x1xf32>, vector<2x24x63xf32> -> vector<2x24x64xf32>
    %113 = vector.shape_cast %109 : vector<24x64xf32> to vector<1x24x64xf32>
    %114 = vector.broadcast %113 : vector<1x24x64xf32> to vector<2x24x64xf32>
    %115 = arith.mulf %112, %114 : vector<2x24x64xf32>
    %116 = arith.addf %102, %115 : vector<2x24x64xf32>
    %c2_70 = arith.constant 2 : index
    %c1_71 = arith.constant 1 : index
    %c0_72 = arith.constant 0 : index
    %c0_73 = arith.constant 0 : index
    %117 = vector.load %arg4[%c2_70, %c1_71, %c0_72, %c0_73] : memref<3x3x24x1xf32, #tpu.memory_space<vmem>>, vector<1x1x24x1xf32>
    %118 = vector.shape_cast %117 : vector<1x1x24x1xf32> to vector<24x1xf32>
    %119 = vector.shape_cast %118 : vector<24x1xf32> to vector<1x24x1xf32>
    %120 = vector.broadcast %119 : vector<1x24x1xf32> to vector<2x24x64xf32>
    %121 = arith.mulf %27, %120 : vector<2x24x64xf32>
    %122 = arith.addf %116, %121 : vector<2x24x64xf32>
    %c2_74 = arith.constant 2 : index
    %c2_75 = arith.constant 2 : index
    %c0_76 = arith.constant 0 : index
    %c0_77 = arith.constant 0 : index
    %123 = vector.load %arg4[%c2_74, %c2_75, %c0_76, %c0_77] : memref<3x3x24x1xf32, #tpu.memory_space<vmem>>, vector<1x1x24x1xf32>
    %124 = vector.shape_cast %123 : vector<1x1x24x1xf32> to vector<24x1xf32>
    %125 = vector.shape_cast %124 : vector<24x1xf32> to vector<1x24x1xf32>
    %126 = vector.broadcast %125 : vector<1x24x1xf32> to vector<2x24x64xf32>
    %127 = arith.mulf %35, %126 : vector<2x24x64xf32>
    %128 = arith.addf %122, %127 : vector<2x24x64xf32>
    %c0_78 = arith.constant 0 : index
    %c0_79 = arith.constant 0 : index
    %129 = vector.load %arg5[%c0_78, %c0_79] : memref<24x1xf32, #tpu.memory_space<vmem>>, vector<24x1xf32>
    %130 = vector.shape_cast %129 : vector<24x1xf32> to vector<1x24x1xf32>
    %131 = vector.broadcast %130 : vector<1x24x1xf32> to vector<2x24x64xf32>
    %132 = arith.addf %128, %131 : vector<2x24x64xf32>
    %cst_80 = arith.constant 0.000000e+00 : f32
    %133 = vector.broadcast %cst_80 : f32 to vector<2x24x64xf32>
    %134 = arith.maximumf %132, %133 : vector<2x24x64xf32>
    %c0_81 = arith.constant 0 : index
    %c0_82 = arith.constant 0 : index
    %135 = vector.load %arg6[%c0_81, %c0_82] : memref<8x24xf32, #tpu.memory_space<vmem>>, vector<8x24xf32>
    %136 = vector.shape_cast %135 : vector<8x24xf32> to vector<1x8x24xf32>
    %137 = vector.broadcast %136 : vector<1x8x24xf32> to vector<2x8x24xf32>
    "tpu.trace_start"() <{level = 10 : i32, message = "boc,bcs->bos"}> : () -> ()
    %cst_83 = arith.constant dense<0.000000e+00> : vector<2x8x64xf32>
    %138 = tpu.matmul %137, %134, %cst_83 {dimension_numbers = #tpu.dot_dimension_numbers<[2], [1], [1], [2], [0, 0, 0, 1, 1, 2], [0], [0]>} : vector<2x8x24xf32>, vector<2x24x64xf32>, vector<2x8x64xf32> -> vector<2x8x64xf32>
    "tpu.trace_stop"() : () -> ()
    %c0_84 = arith.constant 0 : index
    %c0_85 = arith.constant 0 : index
    %139 = vector.load %arg7[%c0_84, %c0_85] : memref<8x1xf32, #tpu.memory_space<vmem>>, vector<8x1xf32>
    %140 = vector.shape_cast %139 : vector<8x1xf32> to vector<1x8x1xf32>
    %141 = vector.broadcast %140 : vector<1x8x1xf32> to vector<2x8x64xf32>
    %142 = arith.addf %138, %141 : vector<2x8x64xf32>
    %c0_86 = arith.constant 0 : index
    %c0_87 = arith.constant 0 : index
    %c0_88 = arith.constant 0 : index
    %143 = vector.load %arg9[%c0_86, %c0_87, %c0_88] : memref<2x8x64xf32, #tpu.memory_space<vmem>>, vector<2x8x64xf32>
    tpu.vector_store %arg9[%c0_86, %c0_87, %c0_88], %142 {strides = array<i32>} : memref<2x8x64xf32, #tpu.memory_space<vmem>>, vector<2x8x64xf32>,
    return
  }
  func.func @transform_0(%arg0: i32) -> (i32, i32, i32, i32) {
    %c0_i32 = arith.constant 0 : i32
    %c0_i32_0 = arith.constant 0 : i32
    %c0_i32_1 = arith.constant 0 : i32
    %c0_i32_2 = arith.constant 0 : i32
    return %arg0, %c0_i32, %c0_i32_0, %c0_i32_1 : i32, i32, i32, i32
  }
  func.func @transform_1(%arg0: i32) -> (i32, i32) {
    %c0_i32 = arith.constant 0 : i32
    %c0_i32_0 = arith.constant 0 : i32
    %c0_i32_1 = arith.constant 0 : i32
    return %c0_i32, %c0_i32_0 : i32, i32
  }
  func.func @transform_2(%arg0: i32) -> (i32, i32) {
    %c0_i32 = arith.constant 0 : i32
    %c0_i32_0 = arith.constant 0 : i32
    %c0_i32_1 = arith.constant 0 : i32
    return %c0_i32, %c0_i32_0 : i32, i32
  }
  func.func @transform_3(%arg0: i32) -> (i32, i32, i32, i32) {
    %c0_i32 = arith.constant 0 : i32
    %c0_i32_0 = arith.constant 0 : i32
    %c0_i32_1 = arith.constant 0 : i32
    %c0_i32_2 = arith.constant 0 : i32
    %c0_i32_3 = arith.constant 0 : i32
    return %c0_i32, %c0_i32_0, %c0_i32_1, %c0_i32_2 : i32, i32, i32, i32
  }
  func.func @transform_4(%arg0: i32) -> (i32, i32) {
    %c0_i32 = arith.constant 0 : i32
    %c0_i32_0 = arith.constant 0 : i32
    %c0_i32_1 = arith.constant 0 : i32
    return %c0_i32, %c0_i32_0 : i32, i32
  }
  func.func @transform_5(%arg0: i32) -> (i32, i32) {
    %c0_i32 = arith.constant 0 : i32
    %c0_i32_0 = arith.constant 0 : i32
    %c0_i32_1 = arith.constant 0 : i32
    return %c0_i32, %c0_i32_0 : i32, i32
  }
  func.func @transform_6(%arg0: i32) -> (i32, i32) {
    %c0_i32 = arith.constant 0 : i32
    %c0_i32_0 = arith.constant 0 : i32
    %c0_i32_1 = arith.constant 0 : i32
    return %c0_i32, %c0_i32_0 : i32, i32
  }
  func.func @transform_7(%arg0: i32) -> (i32, i32, i32) {
    %c0_i32 = arith.constant 0 : i32
    %c0_i32_0 = arith.constant 0 : i32
    %c0_i32_1 = arith.constant 0 : i32
    %c0_i32_2 = arith.constant 0 : i32
    return %c0_i32, %c0_i32_0, %c0_i32_1 : i32, i32, i32
  }
  func.func @transform_8(%arg0: i32) -> (i32, i32, i32) {
    %c0_i32 = arith.constant 0 : i32
    %c0_i32_0 = arith.constant 0 : i32
    %c0_i32_1 = arith.constant 0 : i32
    return %arg0, %c0_i32, %c0_i32_0 : i32, i32, i32
  }
}

</mosaic_0001>

<llo_original>
// kernel: tpu_custom_call.1
$region0: #{tpu_custom_call.1}
  #allocation0 [shape = 'u32[]', space=smem, size = 0x4, offset = 0x4, fixed_abs, tag = 'smem constant byte address 0x4 - core index']
  #allocation1 [shape = 'u32[144,128]{1,0:T(1,128)}', space=vmem, size = 0x12000, scoped, tag = 'internal scratch']
  %s0 = inlined_call_operand.vmem [shape: f32[2,4,4,64], index: 0, kind: input, shape index: {}]
  %s1 = inlined_call_operand.vmem [shape: f32[24,4], index: 1, kind: input, shape index: {}]
  %s2 = inlined_call_operand.vmem [shape: f32[24,1], index: 2, kind: input, shape index: {}]
  %s3 = inlined_call_operand.vmem [shape: f32[3,3,24,1], index: 3, kind: input, shape index: {}]
  %s4 = inlined_call_operand.vmem [shape: f32[24,1], index: 4, kind: input, shape index: {}]
  %s5 = inlined_call_operand.vmem [shape: f32[8,24], index: 5, kind: input, shape index: {}]
  %s6 = inlined_call_operand.vmem [shape: f32[8,1], index: 6, kind: input, shape index: {}]
  %s7 = inlined_call_operand.vmem [shape: f32[9,1,64], index: 7, kind: input, shape index: {}]
  %s8 = inlined_call_operand.hbm [shape: f32[2,8,64], index: 8, kind: output, shape index: {}]
  %s9 = sld [smem:[#allocation0]]
  $region42: #{tpu_custom_call.1} parent=0
    _
  %s11 = ssub.s32 1, %s9
  %s12 = scalar_select 0, %s11, %s9
  $region1: #{tpu_custom_call.1} parent=0
    #allocation2 [shape = 'u8[8192]{0}', space=vmem, size = 0x2000, scoped, tag = 'output window, operand 0, single buffered']
    #allocation3 [shape = 's32[1]{0}', space=sflag, size = 0x4, scoped, tag = 'scoped memory for tpu_custom_call.1']
    %13 = vsyncpa [#allocation3], 0
    // Predicated region
    $region2: #{tpu_custom_call.1} parent=1 // pred_check
      _
    $region3: #{tpu_custom_call.1} parent=1 // pred_check_branch
      %15 = sbr.rel (0) target = $region5
    $region4: #{tpu_custom_call.1} parent=1 // pred_region
      _
    $region5: #{tpu_custom_call.1} parent=1 // pred_fallthru
      _
    // Predicated region
    $region6: #{tpu_custom_call.1} parent=1 // pred_check
      _
    $region7: #{tpu_custom_call.1} parent=1 // pred_check_branch
      %17 = sbr.rel (0) target = $region9
    $region8: #{tpu_custom_call.1} parent=1 // pred_region
      _
    $region9: #{tpu_custom_call.1} parent=1 // pred_fallthru
      _
    // Predicated region
    $region10: #{tpu_custom_call.1} parent=1 // pred_check
      _
    $region11: #{tpu_custom_call.1} parent=1 // pred_check_branch
      %19 = sbr.rel (0) target = $region13
    $region12: #{tpu_custom_call.1} parent=1 // pred_region
      _
    $region13: #{tpu_custom_call.1} parent=1 // pred_fallthru
      _
    // Predicated region
    $region14: #{tpu_custom_call.1} parent=1 // pred_check
      _
    $region15: #{tpu_custom_call.1} parent=1 // pred_check_branch
      %21 = sbr.rel (0) target = $region17
    $region16: #{tpu_custom_call.1} parent=1 // pred_region
      _
    $region17: #{tpu_custom_call.1} parent=1 // pred_fallthru
      _
    // Predicated region
    $region18: #{tpu_custom_call.1} parent=1 // pred_check
      _
    $region19: #{tpu_custom_call.1} parent=1 // pred_check_branch
      %23 = sbr.rel (0) target = $region21
    $region20: #{tpu_custom_call.1} parent=1 // pred_region
      _
    $region21: #{tpu_custom_call.1} parent=1 // pred_fallthru
      _
    // Predicated region
    $region22: #{tpu_custom_call.1} parent=1 // pred_check
      _
    $region23: #{tpu_custom_call.1} parent=1 // pred_check_branch
      %25 = sbr.rel (0) target = $region25
    $region24: #{tpu_custom_call.1} parent=1 // pred_region
      _
    $region25: #{tpu_custom_call.1} parent=1 // pred_fallthru
      _
    // Predicated region
    $region26: #{tpu_custom_call.1} parent=1 // pred_check
      _
    $region27: #{tpu_custom_call.1} parent=1 // pred_check_branch
      %27 = sbr.rel (0) target = $region29
    $region28: #{tpu_custom_call.1} parent=1 // pred_region
      _
    $region29: #{tpu_custom_call.1} parent=1 // pred_fallthru
      _
    // Predicated region
    $region30: #{tpu_custom_call.1} parent=1 // pred_check
      _
    $region31: #{tpu_custom_call.1} parent=1 // pred_check_branch
      %29 = sbr.rel (0) target = $region33
    $region32: #{tpu_custom_call.1} parent=1 // pred_region
      _
    $region33: #{tpu_custom_call.1} parent=1 // pred_fallthru
      _
    %v30 = vld [vmem:[%s1] sm:$0xff]
    %v31 = vld [vmem:[%s1 + $0x8] sm:$0xff]
    %v32 = vld [vmem:[%s1 + $0x10] sm:$0xff]
    %v33 = vld [vmem:[%s2] sm:$0xff]
    %v34 = vld [vmem:[%s2 + $0x8] sm:$0xff]
    %v35 = vld [vmem:[%s2 + $0x10] sm:$0xff]
    %v36 = vld [vmem:[%s0] sm:$0xf]
    %v37 = vld [vmem:[%s0 + $0x10] sm:$0xf]
    %39 = vset.pattern.permute.xlu0 0
    %40 = vperm.xlu0 %39, %v33
    %v41 = vpop.permute.xlu0 %40
    %44 = vset.pattern.permute.xlu0 0
    %45 = vperm.xlu0 %44, %v34
    %v46 = vpop.permute.xlu0 %45
    %49 = vset.pattern.permute.xlu0 0
    %50 = vperm.xlu0 %49, %v35
    %v51 = vpop.permute.xlu0 %50
    %vm53 = vcmask 31744
    %v55 = vsel %vm53, %v30, 0
    %v58 = vsel %vm53, %v31, 0
    %v61 = vsel %vm53, %v32, 0
    %vm63 = vcmask 1043456
    %v65 = vsel %vm63, %v36, 0
    %67 = vmatprep.subr.mxu0 0.0
    %68 = vmatpush1.msra.mxu0 %v65
    %69 = vmatprep.subr.mxu0 0.0
    %70 = vmatpush1.msra.mxu0 0.0
    %71 = vmatprep.subr.mxu0 0.0
    %72 = vmatpush1.msra.mxu0 0.0
    %73 = vmatprep.subr.mxu0 0.0
    %74 = vmatpush1.msra.mxu0 0.0
    %75 = vmatprep.subr.mxu0 0.0
    %76 = vmatpush1.msra.mxu0 0.0
    %77 = vmatprep.subr.mxu0 0.0
    %78 = vmatpush1.msra.mxu0 0.0
    %79 = vmatprep.subr.mxu0 0.0
    %80 = vmatpush1.msra.mxu0 0.0
    %81 = vmatprep.subr.mxu0 0.0
    %82 = vmatpush1.msra.mxu0 0.0
    %83 = vmatprep.subr.mxu0 0.0
    %84 = vmatpush1.msra.mxu0 0.0
    %85 = vmatprep.subr.mxu0 0.0
    %86 = vmatpush1.msra.mxu0 0.0
    %87 = vmatprep.subr.mxu0 0.0
    %88 = vmatpush1.msra.mxu0 0.0
    %89 = vmatprep.subr.mxu0 0.0
    %90 = vmatpush1.msra.mxu0 0.0
    %91 = vmatprep.subr.mxu0 0.0
    %92 = vmatpush1.msra.mxu0 0.0
    %93 = vmatprep.subr.mxu0 0.0
    %94 = vmatpush1.msra.mxu0 0.0
    %95 = vmatprep.subr.mxu0 0.0
    %96 = vmatpush1.msra.mxu0 0.0
    %97 = vmatprep.subr.mxu0 0.0
    %98 = vmatpush1.msra.mxu0 0.0
    %99 = vmatprep.subr.mxu0 0.0
    %100 = vmatpush1.msra.mxu0 0.0
    %101 = vmatprep.subr.mxu0 0.0
    %102 = vmatpush1.msra.mxu0 0.0
    %103 = vmatprep.subr.mxu0 0.0
    %104 = vmatpush1.msra.mxu0 0.0
    %105 = vmatprep.subr.mxu0 0.0
    %106 = vmatpush1.msra.mxu0 0.0
    %107 = vmatprep.subr.mxu0 0.0
    %108 = vmatpush1.msra.mxu0 0.0
    %109 = vmatprep.subr.mxu0 0.0
    %110 = vmatpush1.msra.mxu0 0.0
    %111 = vmatprep.subr.mxu0 0.0
    %112 = vmatpush1.msra.mxu0 0.0
    %113 = vmatprep.subr.mxu0 0.0
    %114 = vmatpush1.msra.mxu0 0.0
    %115 = vmatprep.subr.mxu0 0.0
    %116 = vmatpush1.msra.mxu0 0.0
    %117 = vmatprep.subr.mxu0 0.0
    %118 = vmatpush1.msra.mxu0 0.0
    %119 = vmatprep.subr.mxu0 0.0
    %120 = vmatpush1.msra.mxu0 0.0
    %121 = vmatprep.subr.mxu0 0.0
    %122 = vmatpush1.msra.mxu0 0.0
    %123 = vmatprep.subr.mxu0 0.0
    %124 = vmatpush1.msra.mxu0 0.0
    %125 = vmatprep.subr.mxu0 0.0
    %126 = vmatpush1.msra.mxu0 0.0
    %127 = vmatprep.subr.mxu0 0.0
    %128 = vmatpush1.msra.mxu0 0.0
    %129 = vmatprep.subr.mxu0 0.0
    %130 = vmatpush1.msra.mxu0 0.0
    %131 = vmatprep.mubr.f32.mxu0 0.0
    %132 = vmatmul.mubr.f32.gmra.mrb[0].mxu0 %v55
    %v133 = vpop.f32.mrb[0].mxu0
    %v134 = vadd.f32 %v41, %v133
    %v135 = vpop.f32.mrb[0].mxu0
    %136 = vmatprep.mubr.f32.mxu0 0.0
    %137 = vmatmul.mubr.f32.gmra.mrb[0].mxu0 %v58
    %v138 = vpop.f32.mrb[0].mxu0
    %v139 = vadd.f32 %v46, %v138
    %v140 = vpop.f32.mrb[0].mxu0
    %141 = vmatprep.mubr.f32.mxu0 0.0
    %142 = vmatmul.mubr.f32.gmra.mrb[0].mxu0 %v61
    %v143 = vpop.f32.mrb[0].mxu0
    %v144 = vadd.f32 %v51, %v143
    %v145 = vpop.f32.mrb[0].mxu0
    %146 = vdwg.mxu0
    %v148 = vsel %vm63, %v37, 0
    %150 = vmatprep.subr.mxu0 0.0
    %151 = vmatpush1.msra.mxu0 %v148
    %152 = vmatprep.subr.mxu0 0.0
    %153 = vmatpush1.msra.mxu0 0.0
    %154 = vmatprep.subr.mxu0 0.0
    %155 = vmatpush1.msra.mxu0 0.0
    %156 = vmatprep.subr.mxu0 0.0
    %157 = vmatpush1.msra.mxu0 0.0
    %158 = vmatprep.subr.mxu0 0.0
    %159 = vmatpush1.msra.mxu0 0.0
    %160 = vmatprep.subr.mxu0 0.0
    %161 = vmatpush1.msra.mxu0 0.0
    %162 = vmatprep.subr.mxu0 0.0
    %163 = vmatpush1.msra.mxu0 0.0
    %164 = vmatprep.subr.mxu0 0.0
    %165 = vmatpush1.msra.mxu0 0.0
    %166 = vmatprep.subr.mxu0 0.0
    %167 = vmatpush1.msra.mxu0 0.0
    %168 = vmatprep.subr.mxu0 0.0
    %169 = vmatpush1.msra.mxu0 0.0
    %170 = vmatprep.subr.mxu0 0.0
    %171 = vmatpush1.msra.mxu0 0.0
    %172 = vmatprep.subr.mxu0 0.0
    %173 = vmatpush1.msra.mxu0 0.0
    %174 = vmatprep.subr.mxu0 0.0
    %175 = vmatpush1.msra.mxu0 0.0
    %176 = vmatprep.subr.mxu0 0.0
    %177 = vmatpush1.msra.mxu0 0.0
    %178 = vmatprep.subr.mxu0 0.0
    %179 = vmatpush1.msra.mxu0 0.0
    %180 = vmatprep.subr.mxu0 0.0
    %181 = vmatpush1.msra.mxu0 0.0
    %182 = vmatprep.subr.mxu0 0.0
    %183 = vmatpush1.msra.mxu0 0.0
    %184 = vmatprep.subr.mxu0 0.0
    %185 = vmatpush1.msra.mxu0 0.0
    %186 = vmatprep.subr.mxu0 0.0
    %187 = vmatpush1.msra.mxu0 0.0
    %188 = vmatprep.subr.mxu0 0.0
    %189 = vmatpush1.msra.mxu0 0.0
    %190 = vmatprep.subr.mxu0 0.0
    %191 = vmatpush1.msra.mxu0 0.0
    %192 = vmatprep.subr.mxu0 0.0
    %193 = vmatpush1.msra.mxu0 0.0
    %194 = vmatprep.subr.mxu0 0.0
    %195 = vmatpush1.msra.mxu0 0.0
    %196 = vmatprep.subr.mxu0 0.0
    %197 = vmatpush1.msra.mxu0 0.0
    %198 = vmatprep.subr.mxu0 0.0
    %199 = vmatpush1.msra.mxu0 0.0
    %200 = vmatprep.subr.mxu0 0.0
    %201 = vmatpush1.msra.mxu0 0.0
    %202 = vmatprep.subr.mxu0 0.0
    %203 = vmatpush1.msra.mxu0 0.0
    %204 = vmatprep.subr.mxu0 0.0
    %205 = vmatpush1.msra.mxu0 0.0
    %206 = vmatprep.subr.mxu0 0.0
    %207 = vmatpush1.msra.mxu0 0.0
    %208 = vmatprep.subr.mxu0 0.0
    %209 = vmatpush1.msra.mxu0 0.0
    %210 = vmatprep.subr.mxu0 0.0
    %211 = vmatpush1.msra.mxu0 0.0
    %212 = vmatprep.subr.mxu0 0.0
    %213 = vmatpush1.msra.mxu0 0.0
    %214 = vmatprep.mubr.f32.mxu0 0.0
    %215 = vmatmul.mubr.f32.gmra.mrb[0].mxu0 %v55
    %v216 = vpop.f32.mrb[0].mxu0
    %v217 = vadd.f32 %v41, %v216
    %v218 = vpop.f32.mrb[0].mxu0
    %219 = vmatprep.mubr.f32.mxu0 0.0
    %220 = vmatmul.mubr.f32.gmra.mrb[0].mxu0 %v58
    %v221 = vpop.f32.mrb[0].mxu0
    %v222 = vadd.f32 %v46, %v221
    %v223 = vpop.f32.mrb[0].mxu0
    %224 = vmatprep.mubr.f32.mxu0 0.0
    %225 = vmatmul.mubr.f32.gmra.mrb[0].mxu0 %v61
    %v226 = vpop.f32.mrb[0].mxu0
    %v227 = vadd.f32 %v51, %v226
    %v228 = vpop.f32.mrb[0].mxu0
    %229 = vdwg.mxu0
    %v230 = vmax.f32 %v134, 0.0
    %v231 = vmax.f32 %v139, 0.0
    %v232 = vmax.f32 %v144, 0.0
    %v233 = vmax.f32 %v217, 0.0
    %v234 = vmax.f32 %v222, 0.0
    %v235 = vmax.f32 %v227, 0.0
    %s236 = scalar_lea.vmem %s0, 4
    %v237 = vld [vmem:[%s236] sm:$0xf]
    %v238 = vld [vmem:[%s236 + $0x10] sm:$0xf]
    %v240 = vsel %vm63, %v237, 0
    %242 = vmatprep.subr.mxu0 0.0
    %243 = vmatpush1.msra.mxu0 %v240
    %244 = vmatprep.subr.mxu0 0.0
    %245 = vmatpush1.msra.mxu0 0.0
    %246 = vmatprep.subr.mxu0 0.0
    %247 = vmatpush1.msra.mxu0 0.0
    %248 = vmatprep.subr.mxu0 0.0
    %249 = vmatpush1.msra.mxu0 0.0
    %250 = vmatprep.subr.mxu0 0.0
    %251 = vmatpush1.msra.mxu0 0.0
    %252 = vmatprep.subr.mxu0 0.0
    %253 = vmatpush1.msra.mxu0 0.0
    %254 = vmatprep.subr.mxu0 0.0
    %255 = vmatpush1.msra.mxu0 0.0
    %256 = vmatprep.subr.mxu0 0.0
    %257 = vmatpush1.msra.mxu0 0.0
    %258 = vmatprep.subr.mxu0 0.0
    %259 = vmatpush1.msra.mxu0 0.0
    %260 = vmatprep.subr.mxu0 0.0
    %261 = vmatpush1.msra.mxu0 0.0
    %262 = vmatprep.subr.mxu0 0.0
    %263 = vmatpush1.msra.mxu0 0.0
    %264 = vmatprep.subr.mxu0 0.0
    %265 = vmatpush1.msra.mxu0 0.0
    %266 = vmatprep.subr.mxu0 0.0
    %267 = vmatpush1.msra.mxu0 0.0
    %268 = vmatprep.subr.mxu0 0.0
    %269 = vmatpush1.msra.mxu0 0.0
    %270 = vmatprep.subr.mxu0 0.0
    %271 = vmatpush1.msra.mxu0 0.0
    %272 = vmatprep.subr.mxu0 0.0
    %273 = vmatpush1.msra.mxu0 0.0
    %274 = vmatprep.subr.mxu0 0.0
    %275 = vmatpush1.msra.mxu0 0.0
    %276 = vmatprep.subr.mxu0 0.0
    %277 = vmatpush1.msra.mxu0 0.0
    %278 = vmatprep.subr.mxu0 0.0
    %279 = vmatpush1.msra.mxu0 0.0
    %280 = vmatprep.subr.mxu0 0.0
    %281 = vmatpush1.msra.mxu0 0.0
    %282 = vmatprep.subr.mxu0 0.0
    %283 = vmatpush1.msra.mxu0 0.0
    %284 = vmatprep.subr.mxu0 0.0
    %285 = vmatpush1.msra.mxu0 0.0
    %286 = vmatprep.subr.mxu0 0.0
    %287 = vmatpush1.msra.mxu0 0.0
    %288 = vmatprep.subr.mxu0 0.0
    %289 = vmatpush1.msra.mxu0 0.0
    %290 = vmatprep.subr.mxu0 0.0
    %291 = vmatpush1.msra.mxu0 0.0
    %292 = vmatprep.subr.mxu0 0.0
    %293 = vmatpush1.msra.mxu0 0.0
    %294 = vmatprep.subr.mxu0 0.0
    %295 = vmatpush1.msra.mxu0 0.0
    %296 = vmatprep.subr.mxu0 0.0
    %297 = vmatpush1.msra.mxu0 0.0
    %298 = vmatprep.subr.mxu0 0.0
    %299 = vmatpush1.msra.mxu0 0.0
    %300 = vmatprep.subr.mxu0 0.0
    %301 = vmatpush1.msra.mxu0 0.0
    %302 = vmatprep.subr.mxu0 0.0
    %303 = vmatpush1.msra.mxu0 0.0
    %304 = vmatprep.subr.mxu0 0.0
    %305 = vmatpush1.msra.mxu0 0.0
    %306 = vmatprep.mubr.f32.mxu0 0.0
    %307 = vmatmul.mubr.f32.gmra.mrb[0].mxu0 %v55
    %v308 = vpop.f32.mrb[0].mxu0
    %v309 = vadd.f32 %v41, %v308
    %v310 = vpop.f32.mrb[0].mxu0
    %311 = vmatprep.mubr.f32.mxu0 0.0
    %312 = vmatmul.mubr.f32.gmra.mrb[0].mxu0 %v58
    %v313 = vpop.f32.mrb[0].mxu0
    %v314 = vadd.f32 %v46, %v313
    %v315 = vpop.f32.mrb[0].mxu0
    %316 = vmatprep.mubr.f32.mxu0 0.0
    %317 = vmatmul.mubr.f32.gmra.mrb[0].mxu0 %v61
    %v318 = vpop.f32.mrb[0].mxu0
    %v319 = vadd.f32 %v51, %v318
    %v320 = vpop.f32.mrb[0].mxu0
    %321 = vdwg.mxu0
    %v323 = vsel %vm63, %v238, 0
    %325 = vmatprep.subr.mxu0 0.0
    %326 = vmatpush1.msra.mxu0 %v323
    %327 = vmatprep.subr.mxu0 0.0
    %328 = vmatpush1.msra.mxu0 0.0
    %329 = vmatprep.subr.mxu0 0.0
    %330 = vmatpush1.msra.mxu0 0.0
    %331 = vmatprep.subr.mxu0 0.0
    %332 = vmatpush1.msra.mxu0 0.0
    %333 = vmatprep.subr.mxu0 0.0
    %334 = vmatpush1.msra.mxu0 0.0
    %335 = vmatprep.subr.mxu0 0.0
    %336 = vmatpush1.msra.mxu0 0.0
    %337 = vmatprep.subr.mxu0 0.0
    %338 = vmatpush1.msra.mxu0 0.0
    %339 = vmatprep.subr.mxu0 0.0
    %340 = vmatpush1.msra.mxu0 0.0
    %341 = vmatprep.subr.mxu0 0.0
    %342 = vmatpush1.msra.mxu0 0.0
    %343 = vmatprep.subr.mxu0 0.0
    %344 = vmatpush1.msra.mxu0 0.0
    %345 = vmatprep.subr.mxu0 0.0
    %346 = vmatpush1.msra.mxu0 0.0
    %347 = vmatprep.subr.mxu0 0.0
    %348 = vmatpush1.msra.mxu0 0.0
    %349 = vmatprep.subr.mxu0 0.0
    %350 = vmatpush1.msra.mxu0 0.0
    %351 = vmatprep.subr.mxu0 0.0
    %352 = vmatpush1.msra.mxu0 0.0
    %353 = vmatprep.subr.mxu0 0.0
    %354 = vmatpush1.msra.mxu0 0.0
    %355 = vmatprep.subr.mxu0 0.0
    %356 = vmatpush1.msra.mxu0 0.0
    %357 = vmatprep.subr.mxu0 0.0
    %358 = vmatpush1.msra.mxu0 0.0
    %359 = vmatprep.subr.mxu0 0.0
    %360 = vmatpush1.msra.mxu0 0.0
    %361 = vmatprep.subr.mxu0 0.0
    %362 = vmatpush1.msra.mxu0 0.0
    %363 = vmatprep.subr.mxu0 0.0
    %364 = vmatpush1.msra.mxu0 0.0
    %365 = vmatprep.subr.mxu0 0.0
    %366 = vmatpush1.msra.mxu0 0.0
    %367 = vmatprep.subr.mxu0 0.0
    %368 = vmatpush1.msra.mxu0 0.0
    %369 = vmatprep.subr.mxu0 0.0
    %370 = vmatpush1.msra.mxu0 0.0
    %371 = vmatprep.subr.mxu0 0.0
    %372 = vmatpush1.msra.mxu0 0.0
    %373 = vmatprep.subr.mxu0 0.0
    %374 = vmatpush1.msra.mxu0 0.0
    %375 = vmatprep.subr.mxu0 0.0
    %376 = vmatpush1.msra.mxu0 0.0
    %377 = vmatprep.subr.mxu0 0.0
    %378 = vmatpush1.msra.mxu0 0.0
    %379 = vmatprep.subr.mxu0 0.0
    %380 = vmatpush1.msra.mxu0 0.0
    %381 = vmatprep.subr.mxu0 0.0
    %382 = vmatpush1.msra.mxu0 0.0
    %383 = vmatprep.subr.mxu0 0.0
    %384 = vmatpush1.msra.mxu0 0.0
    %385 = vmatprep.subr.mxu0 0.0
    %386 = vmatpush1.msra.mxu0 0.0
    %387 = vmatprep.subr.mxu0 0.0
    %388 = vmatpush1.msra.mxu0 0.0
    %389 = vmatprep.mubr.f32.mxu0 0.0
    %390 = vmatmul.mubr.f32.gmra.mrb[0].mxu0 %v55
    %v391 = vpop.f32.mrb[0].mxu0
    %v392 = vadd.f32 %v41, %v391
    %v393 = vpop.f32.mrb[0].mxu0
    %394 = vmatprep.mubr.f32.mxu0 0.0
    %395 = vmatmul.mubr.f32.gmra.mrb[0].mxu0 %v58
    %v396 = vpop.f32.mrb[0].mxu0
    %v397 = vadd.f32 %v46, %v396
    %v398 = vpop.f32.mrb[0].mxu0
    %399 = vmatprep.mubr.f32.mxu0 0.0
    %400 = vmatmul.mubr.f32.gmra.mrb[0].mxu0 %v61
    %v401 = vpop.f32.mrb[0].mxu0
    %v402 = vadd.f32 %v51, %v401
    %v403 = vpop.f32.mrb[0].mxu0
    %404 = vdwg.mxu0
    %v405 = vmax.f32 %v309, 0.0
    %v406 = vmax.f32 %v314, 0.0
    %v407 = vmax.f32 %v319, 0.0
    %v408 = vmax.f32 %v392, 0.0
    %v409 = vmax.f32 %v397, 0.0
    %v410 = vmax.f32 %v402, 0.0
    %s411 = scalar_lea.vmem %s0, 8
    %v412 = vld [vmem:[%s411] sm:$0xf]
    %v413 = vld [vmem:[%s411 + $0x10] sm:$0xf]
    %v415 = vsel %vm63, %v412, 0
    %417 = vmatprep.subr.mxu0 0.0
    %418 = vmatpush1.msra.mxu0 %v415
    %419 = vmatprep.subr.mxu0 0.0
    %420 = vmatpush1.msra.mxu0 0.0
    %421 = vmatprep.subr.mxu0 0.0
    %422 = vmatpush1.msra.mxu0 0.0
    %423 = vmatprep.subr.mxu0 0.0
    %424 = vmatpush1.msra.mxu0 0.0
    %425 = vmatprep.subr.mxu0 0.0
    %426 = vmatpush1.msra.mxu0 0.0
    %427 = vmatprep.subr.mxu0 0.0
    %428 = vmatpush1.msra.mxu0 0.0
    %429 = vmatprep.subr.mxu0 0.0
    %430 = vmatpush1.msra.mxu0 0.0
    %431 = vmatprep.subr.mxu0 0.0
    %432 = vmatpush1.msra.mxu0 0.0
    %433 = vmatprep.subr.mxu0 0.0
    %434 = vmatpush1.msra.mxu0 0.0
    %435 = vmatprep.subr.mxu0 0.0
    %436 = vmatpush1.msra.mxu0 0.0
    %437 = vmatprep.subr.mxu0 0.0
    %438 = vmatpush1.msra.mxu0 0.0
    %439 = vmatprep.subr.mxu0 0.0
    %440 = vmatpush1.msra.mxu0 0.0
    %441 = vmatprep.subr.mxu0 0.0
    %442 = vmatpush1.msra.mxu0 0.0
    %443 = vmatprep.subr.mxu0 0.0
    %444 = vmatpush1.msra.mxu0 0.0
    %445 = vmatprep.subr.mxu0 0.0
    %446 = vmatpush1.msra.mxu0 0.0
    %447 = vmatprep.subr.mxu0 0.0
    %448 = vmatpush1.msra.mxu0 0.0
    %449 = vmatprep.subr.mxu0 0.0
    %450 = vmatpush1.msra.mxu0 0.0
    %451 = vmatprep.subr.mxu0 0.0
    %452 = vmatpush1.msra.mxu0 0.0
    %453 = vmatprep.subr.mxu0 0.0
    %454 = vmatpush1.msra.mxu0 0.0
    %455 = vmatprep.subr.mxu0 0.0
    %456 = vmatpush1.msra.mxu0 0.0
    %457 = vmatprep.subr.mxu0 0.0
    %458 = vmatpush1.msra.mxu0 0.0
    %459 = vmatprep.subr.mxu0 0.0
    %460 = vmatpush1.msra.mxu0 0.0
    %461 = vmatprep.subr.mxu0 0.0
    %462 = vmatpush1.msra.mxu0 0.0
    %463 = vmatprep.subr.mxu0 0.0
    %464 = vmatpush1.msra.mxu0 0.0
    %465 = vmatprep.subr.mxu0 0.0
    %466 = vmatpush1.msra.mxu0 0.0
    %467 = vmatprep.subr.mxu0 0.0
    %468 = vmatpush1.msra.mxu0 0.0
    %469 = vmatprep.subr.mxu0 0.0
    %470 = vmatpush1.msra.mxu0 0.0
    %471 = vmatprep.subr.mxu0 0.0
    %472 = vmatpush1.msra.mxu0 0.0
    %473 = vmatprep.subr.mxu0 0.0
    %474 = vmatpush1.msra.mxu0 0.0
    %475 = vmatprep.subr.mxu0 0.0
    %476 = vmatpush1.msra.mxu0 0.0
    %477 = vmatprep.subr.mxu0 0.0
    %478 = vmatpush1.msra.mxu0 0.0
    %479 = vmatprep.subr.mxu0 0.0
    %480 = vmatpush1.msra.mxu0 0.0
    %481 = vmatprep.mubr.f32.mxu0 0.0
    %482 = vmatmul.mubr.f32.gmra.mrb[0].mxu0 %v55
    %v483 = vpop.f32.mrb[0].mxu0
    %v484 = vadd.f32 %v41, %v483
    %v485 = vpop.f32.mrb[0].mxu0
    %486 = vmatprep.mubr.f32.mxu0 0.0
    %487 = vmatmul.mubr.f32.gmra.mrb[0].mxu0 %v58
    %v488 = vpop.f32.mrb[0].mxu0
    %v489 = vadd.f32 %v46, %v488
    %v490 = vpop.f32.mrb[0].mxu0
    %491 = vmatprep.mubr.f32.mxu0 0.0
    %492 = vmatmul.mubr.f32.gmra.mrb[0].mxu0 %v61
    %v493 = vpop.f32.mrb[0].mxu0
    %v494 = vadd.f32 %v51, %v493
    %v495 = vpop.f32.mrb[0].mxu0
    %496 = vdwg.mxu0
    %v498 = vsel %vm63, %v413, 0
    %500 = vmatprep.subr.mxu0 0.0
    %501 = vmatpush1.msra.mxu0 %v498
    %502 = vmatprep.subr.mxu0 0.0
    %503 = vmatpush1.msra.mxu0 0.0
    %504 = vmatprep.subr.mxu0 0.0
    %505 = vmatpush1.msra.mxu0 0.0
    %506 = vmatprep.subr.mxu0 0.0
    %507 = vmatpush1.msra.mxu0 0.0
    %508 = vmatprep.subr.mxu0 0.0
    %509 = vmatpush1.msra.mxu0 0.0
    %510 = vmatprep.subr.mxu0 0.0
    %511 = vmatpush1.msra.mxu0 0.0
    %512 = vmatprep.subr.mxu0 0.0
    %513 = vmatpush1.msra.mxu0 0.0
    %514 = vmatprep.subr.mxu0 0.0
    %515 = vmatpush1.msra.mxu0 0.0
    %516 = vmatprep.subr.mxu0 0.0
    %517 = vmatpush1.msra.mxu0 0.0
    %518 = vmatprep.subr.mxu0 0.0
    %519 = vmatpush1.msra.mxu0 0.0
    %520 = vmatprep.subr.mxu0 0.0
    %521 = vmatpush1.msra.mxu0 0.0
    %522 = vmatprep.subr.mxu0 0.0
    %523 = vmatpush1.msra.mxu0 0.0
    %524 = vmatprep.subr.mxu0 0.0
    %525 = vmatpush1.msra.mxu0 0.0
    %526 = vmatprep.subr.mxu0 0.0
    %527 = vmatpush1.msra.mxu0 0.0
    %528 = vmatprep.subr.mxu0 0.0
    %529 = vmatpush1.msra.mxu0 0.0
    %530 = vmatprep.subr.mxu0 0.0
    %531 = vmatpush1.msra.mxu0 0.0
    %532 = vmatprep.subr.mxu0 0.0
    %533 = vmatpush1.msra.mxu0 0.0
    %534 = vmatprep.subr.mxu0 0.0
    %535 = vmatpush1.msra.mxu0 0.0
    %536 = vmatprep.subr.mxu0 0.0
    %537 = vmatpush1.msra.mxu0 0.0
    %538 = vmatprep.subr.mxu0 0.0
    %539 = vmatpush1.msra.mxu0 0.0
    %540 = vmatprep.subr.mxu0 0.0
    %541 = vmatpush1.msra.mxu0 0.0
    %542 = vmatprep.subr.mxu0 0.0
    %543 = vmatpush1.msra.mxu0 0.0
    %544 = vmatprep.subr.mxu0 0.0
    %545 = vmatpush1.msra.mxu0 0.0
    %546 = vmatprep.subr.mxu0 0.0
    %547 = vmatpush1.msra.mxu0 0.0
    %548 = vmatprep.subr.mxu0 0.0
    %549 = vmatpush1.msra.mxu0 0.0
    %550 = vmatprep.subr.mxu0 0.0
    %551 = vmatpush1.msra.mxu0 0.0
    %552 = vmatprep.subr.mxu0 0.0
    %553 = vmatpush1.msra.mxu0 0.0
    %554 = vmatprep.subr.mxu0 0.0
    %555 = vmatpush1.msra.mxu0 0.0
    %556 = vmatprep.subr.mxu0 0.0
    %557 = vmatpush1.msra.mxu0 0.0
    %558 = vmatprep.subr.mxu0 0.0
    %559 = vmatpush1.msra.mxu0 0.0
    %560 = vmatprep.subr.mxu0 0.0
    %561 = vmatpush1.msra.mxu0 0.0
    %562 = vmatprep.subr.mxu0 0.0
    %563 = vmatpush1.msra.mxu0 0.0
    %564 = vmatprep.mubr.f32.mxu0 0.0
    %565 = vmatmul.mubr.f32.gmra.mrb[0].mxu0 %v55
    %v566 = vpop.f32.mrb[0].mxu0
    %v567 = vadd.f32 %v41, %v566
    %v568 = vpop.f32.mrb[0].mxu0
    %569 = vmatprep.mubr.f32.mxu0 0.0
    %570 = vmatmul.mubr.f32.gmra.mrb[0].mxu0 %v58
    %v571 = vpop.f32.mrb[0].mxu0
    %v572 = vadd.f32 %v46, %v571
    %v573 = vpop.f32.mrb[0].mxu0
    %574 = vmatprep.mubr.f32.mxu0 0.0
    %575 = vmatmul.mubr.f32.gmra.mrb[0].mxu0 %v61
    %v576 = vpop.f32.mrb[0].mxu0
    %v577 = vadd.f32 %v51, %v576
    %v578 = vpop.f32.mrb[0].mxu0
    %579 = vdwg.mxu0
    %v580 = vmax.f32 %v484, 0.0
    %v581 = vmax.f32 %v489, 0.0
    %v582 = vmax.f32 %v494, 0.0
    %v583 = vmax.f32 %v567, 0.0
    %v584 = vmax.f32 %v572, 0.0
    %v585 = vmax.f32 %v577, 0.0
    %s586 = scalar_lea.vmem %s0, 12
    %v587 = vld [vmem:[%s586] sm:$0xf]
    %v588 = vld [vmem:[%s586 + $0x10] sm:$0xf]
    %v590 = vsel %vm63, %v587, 0
    %592 = vmatprep.subr.mxu0 0.0
    %593 = vmatpush1.msra.mxu0 %v590
    %594 = vmatprep.subr.mxu0 0.0
    %595 = vmatpush1.msra.mxu0 0.0
    %596 = vmatprep.subr.mxu0 0.0
    %597 = vmatpush1.msra.mxu0 0.0
    %598 = vmatprep.subr.mxu0 0.0
    %599 = vmatpush1.msra.mxu0 0.0
    %600 = vmatprep.subr.mxu0 0.0
    %601 = vmatpush1.msra.mxu0 0.0
    %602 = vmatprep.subr.mxu0 0.0
    %603 = vmatpush1.msra.mxu0 0.0
    %604 = vmatprep.subr.mxu0 0.0
    %605 = vmatpush1.msra.mxu0 0.0
    %606 = vmatprep.subr.mxu0 0.0
    %607 = vmatpush1.msra.mxu0 0.0
    %608 = vmatprep.subr.mxu0 0.0
    %609 = vmatpush1.msra.mxu0 0.0
    %610 = vmatprep.subr.mxu0 0.0
    %611 = vmatpush1.msra.mxu0 0.0
    %612 = vmatprep.subr.mxu0 0.0
    %613 = vmatpush1.msra.mxu0 0.0
    %614 = vmatprep.subr.mxu0 0.0
    %615 = vmatpush1.msra.mxu0 0.0
    %616 = vmatprep.subr.mxu0 0.0
    %617 = vmatpush1.msra.mxu0 0.0
    %618 = vmatprep.subr.mxu0 0.0
    %619 = vmatpush1.msra.mxu0 0.0
    %620 = vmatprep.subr.mxu0 0.0
    %621 = vmatpush1.msra.mxu0 0.0
    %622 = vmatprep.subr.mxu0 0.0
    %623 = vmatpush1.msra.mxu0 0.0
    %624 = vmatprep.subr.mxu0 0.0
    %625 = vmatpush1.msra.mxu0 0.0
    %626 = vmatprep.subr.mxu0 0.0
    %627 = vmatpush1.msra.mxu0 0.0
    %628 = vmatprep.subr.mxu0 0.0
    %629 = vmatpush1.msra.mxu0 0.0
    %630 = vmatprep.subr.mxu0 0.0
    %631 = vmatpush1.msra.mxu0 0.0
    %632 = vmatprep.subr.mxu0 0.0
    %633 = vmatpush1.msra.mxu0 0.0
    %634 = vmatprep.subr.mxu0 0.0
    %635 = vmatpush1.msra.mxu0 0.0
    %636 = vmatprep.subr.mxu0 0.0
    %637 = vmatpush1.msra.mxu0 0.0
    %638 = vmatprep.subr.mxu0 0.0
    %639 = vmatpush1.msra.mxu0 0.0
    %640 = vmatprep.subr.mxu0 0.0
    %641 = vmatpush1.msra.mxu0 0.0
    %642 = vmatprep.subr.mxu0 0.0
    %643 = vmatpush1.msra.mxu0 0.0
    %644 = vmatprep.subr.mxu0 0.0
    %645 = vmatpush1.msra.mxu0 0.0
    %646 = vmatprep.subr.mxu0 0.0
    %647 = vmatpush1.msra.mxu0 0.0
    %648 = vmatprep.subr.mxu0 0.0
    %649 = vmatpush1.msra.mxu0 0.0
    %650 = vmatprep.subr.mxu0 0.0
    %651 = vmatpush1.msra.mxu0 0.0
    %652 = vmatprep.subr.mxu0 0.0
    %653 = vmatpush1.msra.mxu0 0.0
    %654 = vmatprep.subr.mxu0 0.0
    %655 = vmatpush1.msra.mxu0 0.0
    %656 = vmatprep.mubr.f32.mxu0 0.0
    %657 = vmatmul.mubr.f32.gmra.mrb[0].mxu0 %v55
    %v658 = vpop.f32.mrb[0].mxu0
    %v659 = vadd.f32 %v41, %v658
    %v660 = vpop.f32.mrb[0].mxu0
    %661 = vmatprep.mubr.f32.mxu0 0.0
    %662 = vmatmul.mubr.f32.gmra.mrb[0].mxu0 %v58
    %v663 = vpop.f32.mrb[0].mxu0
    %v664 = vadd.f32 %v46, %v663
    %v665 = vpop.f32.mrb[0].mxu0
    %666 = vmatprep.mubr.f32.mxu0 0.0
    %667 = vmatmul.mubr.f32.gmra.mrb[0].mxu0 %v61
    %v668 = vpop.f32.mrb[0].mxu0
    %v669 = vadd.f32 %v51, %v668
    %v670 = vpop.f32.mrb[0].mxu0
    %671 = vdwg.mxu0
    %v673 = vsel %vm63, %v588, 0
    %675 = vmatprep.subr.mxu0 0.0
    %676 = vmatpush1.msra.mxu0 %v673
    %677 = vmatprep.subr.mxu0 0.0
    %678 = vmatpush1.msra.mxu0 0.0
    %679 = vmatprep.subr.mxu0 0.0
    %680 = vmatpush1.msra.mxu0 0.0
    %681 = vmatprep.subr.mxu0 0.0
    %682 = vmatpush1.msra.mxu0 0.0
    %683 = vmatprep.subr.mxu0 0.0
    %684 = vmatpush1.msra.mxu0 0.0
    %685 = vmatprep.subr.mxu0 0.0
    %686 = vmatpush1.msra.mxu0 0.0
    %687 = vmatprep.subr.mxu0 0.0
    %688 = vmatpush1.msra.mxu0 0.0
    %689 = vmatprep.subr.mxu0 0.0
    %690 = vmatpush1.msra.mxu0 0.0
    %691 = vmatprep.subr.mxu0 0.0
    %692 = vmatpush1.msra.mxu0 0.0
    %693 = vmatprep.subr.mxu0 0.0
    %694 = vmatpush1.msra.mxu0 0.0
    %695 = vmatprep.subr.mxu0 0.0
    %696 = vmatpush1.msra.mxu0 0.0
    %697 = vmatprep.subr.mxu0 0.0
    %698 = vmatpush1.msra.mxu0 0.0
    %699 = vmatprep.subr.mxu0 0.0
    %700 = vmatpush1.msra.mxu0 0.0
    %701 = vmatprep.subr.mxu0 0.0
    %702 = vmatpush1.msra.mxu0 0.0
    %703 = vmatprep.subr.mxu0 0.0
    %704 = vmatpush1.msra.mxu0 0.0
    %705 = vmatprep.subr.mxu0 0.0
    %706 = vmatpush1.msra.mxu0 0.0
    %707 = vmatprep.subr.mxu0 0.0
    %708 = vmatpush1.msra.mxu0 0.0
    %709 = vmatprep.subr.mxu0 0.0
    %710 = vmatpush1.msra.mxu0 0.0
    %711 = vmatprep.subr.mxu0 0.0
    %712 = vmatpush1.msra.mxu0 0.0
    %713 = vmatprep.subr.mxu0 0.0
    %714 = vmatpush1.msra.mxu0 0.0
    %715 = vmatprep.subr.mxu0 0.0
    %716 = vmatpush1.msra.mxu0 0.0
    %717 = vmatprep.subr.mxu0 0.0
    %718 = vmatpush1.msra.mxu0 0.0
    %719 = vmatprep.subr.mxu0 0.0
    %720 = vmatpush1.msra.mxu0 0.0
    %721 = vmatprep.subr.mxu0 0.0
    %722 = vmatpush1.msra.mxu0 0.0
    %723 = vmatprep.subr.mxu0 0.0
    %724 = vmatpush1.msra.mxu0 0.0
    %725 = vmatprep.subr.mxu0 0.0
    %726 = vmatpush1.msra.mxu0 0.0
    %727 = vmatprep.subr.mxu0 0.0
    %728 = vmatpush1.msra.mxu0 0.0
    %729 = vmatprep.subr.mxu0 0.0
    %730 = vmatpush1.msra.mxu0 0.0
    %731 = vmatprep.subr.mxu0 0.0
    %732 = vmatpush1.msra.mxu0 0.0
    %733 = vmatprep.subr.mxu0 0.0
    %734 = vmatpush1.msra.mxu0 0.0
    %735 = vmatprep.subr.mxu0 0.0
    %736 = vmatpush1.msra.mxu0 0.0
    %737 = vmatprep.subr.mxu0 0.0
    %738 = vmatpush1.msra.mxu0 0.0
    %739 = vmatprep.mubr.f32.mxu0 0.0
    %740 = vmatmul.mubr.f32.gmra.mrb[0].mxu0 %v55
    %v741 = vpop.f32.mrb[0].mxu0
    %v742 = vadd.f32 %v41, %v741
    %v743 = vpop.f32.mrb[0].mxu0
    %744 = vmatprep.mubr.f32.mxu0 0.0
    %745 = vmatmul.mubr.f32.gmra.mrb[0].mxu0 %v58
    %v746 = vpop.f32.mrb[0].mxu0
    %v747 = vadd.f32 %v46, %v746
    %v748 = vpop.f32.mrb[0].mxu0
    %749 = vmatprep.mubr.f32.mxu0 0.0
    %750 = vmatmul.mubr.f32.gmra.mrb[0].mxu0 %v61
    %v751 = vpop.f32.mrb[0].mxu0
    %v752 = vadd.f32 %v51, %v751
    %v753 = vpop.f32.mrb[0].mxu0
    %754 = vdwg.mxu0
    %v755 = vmax.f32 %v659, 0.0
    %v756 = vmax.f32 %v664, 0.0
    %v757 = vmax.f32 %v669, 0.0
    %v758 = vmax.f32 %v742, 0.0
    %v759 = vmax.f32 %v747, 0.0
    %v760 = vmax.f32 %v752, 0.0
    %v761 = vld [vmem:[%s3] sm:$0xff]
    %v762 = vld [vmem:[%s3 + $0x8] sm:$0xff]
    %v763 = vld [vmem:[%s3 + $0x10] sm:$0xff]
    %v764 = vld [vmem:[%s7] sm:$0x1]
    %766 = vset.pattern.permute.xlu0 0
    %767 = vperm.xlu0 %766, %v761
    %v768 = vpop.permute.xlu0 %767
    %771 = vset.pattern.permute.xlu0 0
    %772 = vperm.xlu0 %771, %v762
    %v773 = vpop.permute.xlu0 %772
    %776 = vset.pattern.permute.xlu0 0
    %777 = vperm.xlu0 %776, %v763
    %v778 = vpop.permute.xlu0 %777
    %v781 = vlaneseq
    %v782 = vshrl.u32 %v781, 7
    %v783 = vsub.s32 0, %v782
    %v784 = vrot.slane %v764, %v783
    %v786 = vmul.f32 %v768, %v784
    %v787 = vmul.f32 %v773, %v784
    %v788 = vmul.f32 %v778, %v784
    %795 = vrot.lane.b32.xlu0 %v755, 9
    %v796 = vpop.permute.xlu0 %795
    %797 = vrot.lane.b32.xlu0 %v756, 9
    %v798 = vpop.permute.xlu0 %797
    %799 = vrot.lane.b32.xlu0 %v757, 9
    %v800 = vpop.permute.xlu0 %799
    %801 = vrot.lane.b32.xlu0 %v758, 9
    %v802 = vpop.permute.xlu0 %801
    %803 = vrot.lane.b32.xlu0 %v759, 9
    %v804 = vpop.permute.xlu0 %803
    %805 = vrot.lane.b32.xlu0 %v760, 9
    %v806 = vpop.permute.xlu0 %805
    %vm813 = vcmask 72704
    %v814 = vsel %vm813, 0.0, %v796
    %v815 = vsel %vm813, 0.0, %v798
    %v816 = vsel %vm813, 0.0, %v800
    %v817 = vsel %vm813, 0.0, %v802
    %v818 = vsel %vm813, 0.0, %v804
    %v819 = vsel %vm813, 0.0, %v806
    %v820 = vmul.f32 %v814, %v786
    %v821 = vmul.f32 %v815, %v787
    %v822 = vmul.f32 %v816, %v788
    %v823 = vmul.f32 %v817, %v786
    %v824 = vmul.f32 %v818, %v787
    %v825 = vmul.f32 %v819, %v788
    %s826 = scalar_lea.vmem %s3, 24
    %v827 = vld [vmem:[%s826] sm:$0xff]
    %v828 = vld [vmem:[%s826 + $0x8] sm:$0xff]
    %v829 = vld [vmem:[%s826 + $0x10] sm:$0xff]
    %s830 = scalar_lea.vmem %s7, 1
    %v831 = vld [vmem:[%s830] sm:$0x1]
    %833 = vset.pattern.permute.xlu0 0
    %834 = vperm.xlu0 %833, %v827
    %v835 = vpop.permute.xlu0 %834
    %838 = vset.pattern.permute.xlu0 0
    %839 = vperm.xlu0 %838, %v828
    %v840 = vpop.permute.xlu0 %839
    %843 = vset.pattern.permute.xlu0 0
    %844 = vperm.xlu0 %843, %v829
    %v845 = vpop.permute.xlu0 %844
    %v848 = vlaneseq
    %v849 = vshrl.u32 %v848, 7
    %v850 = vsub.s32 0, %v849
    %v851 = vrot.slane %v831, %v850
    %v853 = vmul.f32 %v835, %v851
    %v854 = vmul.f32 %v840, %v851
    %v855 = vmul.f32 %v845, %v851
    %862 = vrot.lane.b32.xlu0 %v580, 8
    %v863 = vpop.permute.xlu0 %862
    %864 = vrot.lane.b32.xlu0 %v581, 8
    %v865 = vpop.permute.xlu0 %864
    %866 = vrot.lane.b32.xlu0 %v582, 8
    %v867 = vpop.permute.xlu0 %866
    %868 = vrot.lane.b32.xlu0 %v583, 8
    %v869 = vpop.permute.xlu0 %868
    %870 = vrot.lane.b32.xlu0 %v584, 8
    %v871 = vpop.permute.xlu0 %870
    %872 = vrot.lane.b32.xlu0 %v585, 8
    %v873 = vpop.permute.xlu0 %872
    %vm880 = vcmask 64512
    %v881 = vsel %vm880, 0.0, %v863
    %v882 = vsel %vm880, 0.0, %v865
    %v883 = vsel %vm880, 0.0, %v867
    %v884 = vsel %vm880, 0.0, %v869
    %v885 = vsel %vm880, 0.0, %v871
    %v886 = vsel %vm880, 0.0, %v873
    %v887 = vmul.f32 %v881, %v853
    %v888 = vmul.f32 %v882, %v854
    %v889 = vmul.f32 %v883, %v855
    %v890 = vmul.f32 %v884, %v853
    %v891 = vmul.f32 %v885, %v854
    %v892 = vmul.f32 %v886, %v855
    %v893 = vadd.f32 %v820, %v887
    %v894 = vadd.f32 %v821, %v888
    %v895 = vadd.f32 %v822, %v889
    %v896 = vadd.f32 %v823, %v890
    %v897 = vadd.f32 %v824, %v891
    %v898 = vadd.f32 %v825, %v892
    %s899 = scalar_lea.vmem %s3, 48
    %v900 = vld [vmem:[%s899] sm:$0xff]
    %v901 = vld [vmem:[%s899 + $0x8] sm:$0xff]
    %v902 = vld [vmem:[%s899 + $0x10] sm:$0xff]
    %s903 = scalar_lea.vmem %s7, 2
    %v904 = vld [vmem:[%s903] sm:$0x1]
    %906 = vset.pattern.permute.xlu0 0
    %907 = vperm.xlu0 %906, %v900
    %v908 = vpop.permute.xlu0 %907
    %911 = vset.pattern.permute.xlu0 0
    %912 = vperm.xlu0 %911, %v901
    %v913 = vpop.permute.xlu0 %912
    %916 = vset.pattern.permute.xlu0 0
    %917 = vperm.xlu0 %916, %v902
    %v918 = vpop.permute.xlu0 %917
    %v921 = vlaneseq
    %v922 = vshrl.u32 %v921, 7
    %v923 = vsub.s32 0, %v922
    %v924 = vrot.slane %v904, %v923
    %v926 = vmul.f32 %v908, %v924
    %v927 = vmul.f32 %v913, %v924
    %v928 = vmul.f32 %v918, %v924
    %929 = vrot.lane.b32.xlu0 %v755, 8
    %v930 = vpop.permute.xlu0 %929
    %931 = vrot.lane.b32.xlu0 %v756, 8
    %v932 = vpop.permute.xlu0 %931
    %933 = vrot.lane.b32.xlu0 %v757, 8
    %v934 = vpop.permute.xlu0 %933
    %935 = vrot.lane.b32.xlu0 %v758, 8
    %v936 = vpop.permute.xlu0 %935
    %937 = vrot.lane.b32.xlu0 %v759, 8
    %v938 = vpop.permute.xlu0 %937
    %939 = vrot.lane.b32.xlu0 %v760, 8
    %v940 = vpop.permute.xlu0 %939
    %v947 = vsel %vm880, 0.0, %v930
    %v948 = vsel %vm880, 0.0, %v932
    %v949 = vsel %vm880, 0.0, %v934
    %v950 = vsel %vm880, 0.0, %v936
    %v951 = vsel %vm880, 0.0, %v938
    %v952 = vsel %vm880, 0.0, %v940
    %v953 = vmul.f32 %v947, %v926
    %v954 = vmul.f32 %v948, %v927
    %v955 = vmul.f32 %v949, %v928
    %v956 = vmul.f32 %v950, %v926
    %v957 = vmul.f32 %v951, %v927
    %v958 = vmul.f32 %v952, %v928
    %v959 = vadd.f32 %v893, %v953
    %v960 = vadd.f32 %v894, %v954
    %v961 = vadd.f32 %v895, %v955
    %v962 = vadd.f32 %v896, %v956
    %v963 = vadd.f32 %v897, %v957
    %v964 = vadd.f32 %v898, %v958
    %s965 = scalar_lea.vmem %s3, 72
    %v966 = vld [vmem:[%s965] sm:$0xff]
    %v967 = vld [vmem:[%s965 + $0x8] sm:$0xff]
    %v968 = vld [vmem:[%s965 + $0x10] sm:$0xff]
    %s969 = scalar_lea.vmem %s7, 3
    %v970 = vld [vmem:[%s969] sm:$0x1]
    %972 = vset.pattern.permute.xlu0 0
    %973 = vperm.xlu0 %972, %v966
    %v974 = vpop.permute.xlu0 %973
    %977 = vset.pattern.permute.xlu0 0
    %978 = vperm.xlu0 %977, %v967
    %v979 = vpop.permute.xlu0 %978
    %982 = vset.pattern.permute.xlu0 0
    %983 = vperm.xlu0 %982, %v968
    %v984 = vpop.permute.xlu0 %983
    %v987 = vlaneseq
    %v988 = vshrl.u32 %v987, 7
    %v989 = vsub.s32 0, %v988
    %v990 = vrot.slane %v970, %v989
    %v992 = vmul.f32 %v974, %v990
    %v993 = vmul.f32 %v979, %v990
    %v994 = vmul.f32 %v984, %v990
    %1001 = vrot.lane.b32.xlu0 %v405, 1
    %v1002 = vpop.permute.xlu0 %1001
    %1003 = vrot.lane.b32.xlu0 %v406, 1
    %v1004 = vpop.permute.xlu0 %1003
    %1005 = vrot.lane.b32.xlu0 %v407, 1
    %v1006 = vpop.permute.xlu0 %1005
    %1007 = vrot.lane.b32.xlu0 %v408, 1
    %v1008 = vpop.permute.xlu0 %1007
    %1009 = vrot.lane.b32.xlu0 %v409, 1
    %v1010 = vpop.permute.xlu0 %1009
    %1011 = vrot.lane.b32.xlu0 %v410, 1
    %v1012 = vpop.permute.xlu0 %1011
    %vm1019 = vcmask 7168
    %v1020 = vsel %vm1019, 0.0, %v1002
    %v1021 = vsel %vm1019, 0.0, %v1004
    %v1022 = vsel %vm1019, 0.0, %v1006
    %v1023 = vsel %vm1019, 0.0, %v1008
    %v1024 = vsel %vm1019, 0.0, %v1010
    %v1025 = vsel %vm1019, 0.0, %v1012
    %v1026 = vmul.f32 %v1020, %v992
    %v1027 = vmul.f32 %v1021, %v993
    %v1028 = vmul.f32 %v1022, %v994
    %v1029 = vmul.f32 %v1023, %v992
    %v1030 = vmul.f32 %v1024, %v993
    %v1031 = vmul.f32 %v1025, %v994
    %v1032 = vadd.f32 %v959, %v1026
    %v1033 = vadd.f32 %v960, %v1027
    %v1034 = vadd.f32 %v961, %v1028
    %v1035 = vadd.f32 %v962, %v1029
    %v1036 = vadd.f32 %v963, %v1030
    %v1037 = vadd.f32 %v964, %v1031
    %s1038 = scalar_lea.vmem %s3, 96
    %v1039 = vld [vmem:[%s1038] sm:$0xff]
    %v1040 = vld [vmem:[%s1038 + $0x8] sm:$0xff]
    %v1041 = vld [vmem:[%s1038 + $0x10] sm:$0xff]
    %1043 = vset.pattern.permute.xlu0 0
    %1044 = vperm.xlu0 %1043, %v1039
    %v1045 = vpop.permute.xlu0 %1044
    %1048 = vset.pattern.permute.xlu0 0
    %1049 = vperm.xlu0 %1048, %v1040
    %v1050 = vpop.permute.xlu0 %1049
    %1053 = vset.pattern.permute.xlu0 0
    %1054 = vperm.xlu0 %1053, %v1041
    %v1055 = vpop.permute.xlu0 %1054
    %v1057 = vmul.f32 %v230, %v1045
    %v1058 = vmul.f32 %v231, %v1050
    %v1059 = vmul.f32 %v232, %v1055
    %v1060 = vmul.f32 %v233, %v1045
    %v1061 = vmul.f32 %v234, %v1050
    %v1062 = vmul.f32 %v235, %v1055
    %v1063 = vadd.f32 %v1032, %v1057
    %v1064 = vadd.f32 %v1033, %v1058
    %v1065 = vadd.f32 %v1034, %v1059
    %v1066 = vadd.f32 %v1035, %v1060
    %v1067 = vadd.f32 %v1036, %v1061
    %v1068 = vadd.f32 %v1037, %v1062
    %s1069 = scalar_lea.vmem %s3, 120
    %v1070 = vld [vmem:[%s1069] sm:$0xff]
    %v1071 = vld [vmem:[%s1069 + $0x8] sm:$0xff]
    %v1072 = vld [vmem:[%s1069 + $0x10] sm:$0xff]
    %1074 = vset.pattern.permute.xlu0 0
    %1075 = vperm.xlu0 %1074, %v1070
    %v1076 = vpop.permute.xlu0 %1075
    %1079 = vset.pattern.permute.xlu0 0
    %1080 = vperm.xlu0 %1079, %v1071
    %v1081 = vpop.permute.xlu0 %1080
    %1084 = vset.pattern.permute.xlu0 0
    %1085 = vperm.xlu0 %1084, %v1072
    %v1086 = vpop.permute.xlu0 %1085
    %v1088 = vmul.f32 %v405, %v1076
    %v1089 = vmul.f32 %v406, %v1081
    %v1090 = vmul.f32 %v407, %v1086
    %v1091 = vmul.f32 %v408, %v1076
    %v1092 = vmul.f32 %v409, %v1081
    %v1093 = vmul.f32 %v410, %v1086
    %v1094 = vadd.f32 %v1063, %v1088
    %v1095 = vadd.f32 %v1064, %v1089
    %v1096 = vadd.f32 %v1065, %v1090
    %v1097 = vadd.f32 %v1066, %v1091
    %v1098 = vadd.f32 %v1067, %v1092
    %v1099 = vadd.f32 %v1068, %v1093
    %s1100 = scalar_lea.vmem %s3, 144
    %v1101 = vld [vmem:[%s1100] sm:$0xff]
    %v1102 = vld [vmem:[%s1100 + $0x8] sm:$0xff]
    %v1103 = vld [vmem:[%s1100 + $0x10] sm:$0xff]
    %s1104 = scalar_lea.vmem %s7, 6
    %v1105 = vld [vmem:[%s1104] sm:$0x1]
    %1107 = vset.pattern.permute.xlu0 0
    %1108 = vperm.xlu0 %1107, %v1101
    %v1109 = vpop.permute.xlu0 %1108
    %1112 = vset.pattern.permute.xlu0 0
    %1113 = vperm.xlu0 %1112, %v1102
    %v1114 = vpop.permute.xlu0 %1113
    %1117 = vset.pattern.permute.xlu0 0
    %1118 = vperm.xlu0 %1117, %v1103
    %v1119 = vpop.permute.xlu0 %1118
    %v1122 = vlaneseq
    %v1123 = vshrl.u32 %v1122, 7
    %v1124 = vsub.s32 0, %v1123
    %v1125 = vrot.slane %v1105, %v1124
    %v1127 = vmul.f32 %v1109, %v1125
    %v1128 = vmul.f32 %v1114, %v1125
    %v1129 = vmul.f32 %v1119, %v1125
    %1130 = vrot.lane.b32.xlu0 %v755, 1
    %v1131 = vpop.permute.xlu0 %1130
    %1132 = vrot.lane.b32.xlu0 %v756, 1
    %v1133 = vpop.permute.xlu0 %1132
    %1134 = vrot.lane.b32.xlu0 %v757, 1
    %v1135 = vpop.permute.xlu0 %1134
    %1136 = vrot.lane.b32.xlu0 %v758, 1
    %v1137 = vpop.permute.xlu0 %1136
    %1138 = vrot.lane.b32.xlu0 %v759, 1
    %v1139 = vpop.permute.xlu0 %1138
    %1140 = vrot.lane.b32.xlu0 %v760, 1
    %v1141 = vpop.permute.xlu0 %1140
    %v1148 = vsel %vm1019, 0.0, %v1131
    %v1149 = vsel %vm1019, 0.0, %v1133
    %v1150 = vsel %vm1019, 0.0, %v1135
    %v1151 = vsel %vm1019, 0.0, %v1137
    %v1152 = vsel %vm1019, 0.0, %v1139
    %v1153 = vsel %vm1019, 0.0, %v1141
    %v1154 = vmul.f32 %v1148, %v1127
    %v1155 = vmul.f32 %v1149, %v1128
    %v1156 = vmul.f32 %v1150, %v1129
    %v1157 = vmul.f32 %v1151, %v1127
    %v1158 = vmul.f32 %v1152, %v1128
    %v1159 = vmul.f32 %v1153, %v1129
    %v1160 = vadd.f32 %v1094, %v1154
    %v1161 = vadd.f32 %v1095, %v1155
    %v1162 = vadd.f32 %v1096, %v1156
    %v1163 = vadd.f32 %v1097, %v1157
    %v1164 = vadd.f32 %v1098, %v1158
    %v1165 = vadd.f32 %v1099, %v1159
    %s1166 = scalar_lea.vmem %s3, 168
    %v1167 = vld [vmem:[%s1166] sm:$0xff]
    %v1168 = vld [vmem:[%s1166 + $0x8] sm:$0xff]
    %v1169 = vld [vmem:[%s1166 + $0x10] sm:$0xff]
    %1171 = vset.pattern.permute.xlu0 0
    %1172 = vperm.xlu0 %1171, %v1167
    %v1173 = vpop.permute.xlu0 %1172
    %1176 = vset.pattern.permute.xlu0 0
    %1177 = vperm.xlu0 %1176, %v1168
    %v1178 = vpop.permute.xlu0 %1177
    %1181 = vset.pattern.permute.xlu0 0
    %1182 = vperm.xlu0 %1181, %v1169
    %v1183 = vpop.permute.xlu0 %1182
    %v1185 = vmul.f32 %v580, %v1173
    %v1186 = vmul.f32 %v581, %v1178
    %v1187 = vmul.f32 %v582, %v1183
    %v1188 = vmul.f32 %v583, %v1173
    %v1189 = vmul.f32 %v584, %v1178
    %v1190 = vmul.f32 %v585, %v1183
    %v1191 = vadd.f32 %v1160, %v1185
    %v1192 = vadd.f32 %v1161, %v1186
    %v1193 = vadd.f32 %v1162, %v1187
    %v1194 = vadd.f32 %v1163, %v1188
    %v1195 = vadd.f32 %v1164, %v1189
    %v1196 = vadd.f32 %v1165, %v1190
    %s1197 = scalar_lea.vmem %s3, 192
    %v1198 = vld [vmem:[%s1197] sm:$0xff]
    %v1199 = vld [vmem:[%s1197 + $0x8] sm:$0xff]
    %v1200 = vld [vmem:[%s1197 + $0x10] sm:$0xff]
    %1202 = vset.pattern.permute.xlu0 0
    %1203 = vperm.xlu0 %1202, %v1198
    %v1204 = vpop.permute.xlu0 %1203
    %1207 = vset.pattern.permute.xlu0 0
    %1208 = vperm.xlu0 %1207, %v1199
    %v1209 = vpop.permute.xlu0 %1208
    %1212 = vset.pattern.permute.xlu0 0
    %1213 = vperm.xlu0 %1212, %v1200
    %v1214 = vpop.permute.xlu0 %1213
    %v1216 = vmul.f32 %v755, %v1204
    %v1217 = vmul.f32 %v756, %v1209
    %v1218 = vmul.f32 %v757, %v1214
    %v1219 = vmul.f32 %v758, %v1204
    %v1220 = vmul.f32 %v759, %v1209
    %v1221 = vmul.f32 %v760, %v1214
    %v1222 = vadd.f32 %v1191, %v1216
    %v1223 = vadd.f32 %v1192, %v1217
    %v1224 = vadd.f32 %v1193, %v1218
    %v1225 = vadd.f32 %v1194, %v1219
    %v1226 = vadd.f32 %v1195, %v1220
    %v1227 = vadd.f32 %v1196, %v1221
    %v1228 = vld [vmem:[%s4] sm:$0xff]
    %v1229 = vld [vmem:[%s4 + $0x8] sm:$0xff]
    %v1230 = vld [vmem:[%s4 + $0x10] sm:$0xff]
    %1232 = vset.pattern.permute.xlu0 0
    %1233 = vperm.xlu0 %1232, %v1228
    %v1234 = vpop.permute.xlu0 %1233
    %1237 = vset.pattern.permute.xlu0 0
    %1238 = vperm.xlu0 %1237, %v1229
    %v1239 = vpop.permute.xlu0 %1238
    %1242 = vset.pattern.permute.xlu0 0
    %1243 = vperm.xlu0 %1242, %v1230
    %v1244 = vpop.permute.xlu0 %1243
    %v1246 = vadd.f32 %v1222, %v1234
    %v1247 = vadd.f32 %v1223, %v1239
    %v1248 = vadd.f32 %v1224, %v1244
    %v1249 = vadd.f32 %v1225, %v1234
    %v1250 = vadd.f32 %v1226, %v1239
    %v1251 = vadd.f32 %v1227, %v1244
    %v1252 = vmax.f32 %v1246, 0.0
    %v1253 = vmax.f32 %v1247, 0.0
    %v1254 = vmax.f32 %v1248, 0.0
    %v1255 = vmax.f32 %v1249, 0.0
    %v1256 = vmax.f32 %v1250, 0.0
    %v1257 = vmax.f32 %v1251, 0.0
    %v1258 = vld [vmem:[%s5] sm:$0xff]
    %v1259 = vld [vmem:[%s6] sm:$0xff]
    %1261 = vset.pattern.permute.xlu0 0
    %1262 = vperm.xlu0 %1261, %v1259
    %v1263 = vpop.permute.xlu0 %1262
    %vm1265 = vcmask 195584
    %v1267 = vsel %vm1265, %v1258, 0
    %1269 = vmatprep.subr.mxu0 0.0
    %1270 = vmatpush1.msra.mxu0 %v1252
    %1271 = vmatprep.subr.mxu0 0.0
    %1272 = vmatpush1.msra.mxu0 %v1253
    %1273 = vmatprep.subr.mxu0 0.0
    %1274 = vmatpush1.msra.mxu0 %v1254
    %1275 = vmatprep.subr.mxu0 0.0
    %1276 = vmatpush1.msra.mxu0 0.0
    %1277 = vmatprep.subr.mxu0 0.0
    %1278 = vmatpush1.msra.mxu0 0.0
    %1279 = vmatprep.subr.mxu0 0.0
    %1280 = vmatpush1.msra.mxu0 0.0
    %1281 = vmatprep.subr.mxu0 0.0
    %1282 = vmatpush1.msra.mxu0 0.0
    %1283 = vmatprep.subr.mxu0 0.0
    %1284 = vmatpush1.msra.mxu0 0.0
    %1285 = vmatprep.subr.mxu0 0.0
    %1286 = vmatpush1.msra.mxu0 0.0
    %1287 = vmatprep.subr.mxu0 0.0
    %1288 = vmatpush1.msra.mxu0 0.0
    %1289 = vmatprep.subr.mxu0 0.0
    %1290 = vmatpush1.msra.mxu0 0.0
    %1291 = vmatprep.subr.mxu0 0.0
    %1292 = vmatpush1.msra.mxu0 0.0
    %1293 = vmatprep.subr.mxu0 0.0
    %1294 = vmatpush1.msra.mxu0 0.0
    %1295 = vmatprep.subr.mxu0 0.0
    %1296 = vmatpush1.msra.mxu0 0.0
    %1297 = vmatprep.subr.mxu0 0.0
    %1298 = vmatpush1.msra.mxu0 0.0
    %1299 = vmatprep.subr.mxu0 0.0
    %1300 = vmatpush1.msra.mxu0 0.0
    %1301 = vmatprep.subr.mxu0 0.0
    %1302 = vmatpush1.msra.mxu0 0.0
    %1303 = vmatprep.subr.mxu0 0.0
    %1304 = vmatpush1.msra.mxu0 0.0
    %1305 = vmatprep.subr.mxu0 0.0
    %1306 = vmatpush1.msra.mxu0 0.0
    %1307 = vmatprep.subr.mxu0 0.0
    %1308 = vmatpush1.msra.mxu0 0.0
    %1309 = vmatprep.subr.mxu0 0.0
    %1310 = vmatpush1.msra.mxu0 0.0
    %1311 = vmatprep.subr.mxu0 0.0
    %1312 = vmatpush1.msra.mxu0 0.0
    %1313 = vmatprep.subr.mxu0 0.0
    %1314 = vmatpush1.msra.mxu0 0.0
    %1315 = vmatprep.subr.mxu0 0.0
    %1316 = vmatpush1.msra.mxu0 0.0
    %1317 = vmatprep.subr.mxu0 0.0
    %1318 = vmatpush1.msra.mxu0 0.0
    %1319 = vmatprep.subr.mxu0 0.0
    %1320 = vmatpush1.msra.mxu0 0.0
    %1321 = vmatprep.subr.mxu0 0.0
    %1322 = vmatpush1.msra.mxu0 0.0
    %1323 = vmatprep.subr.mxu0 0.0
    %1324 = vmatpush1.msra.mxu0 0.0
    %1325 = vmatprep.subr.mxu0 0.0
    %1326 = vmatpush1.msra.mxu0 0.0
    %1327 = vmatprep.subr.mxu0 0.0
    %1328 = vmatpush1.msra.mxu0 0.0
    %1329 = vmatprep.subr.mxu0 0.0
    %1330 = vmatpush1.msra.mxu0 0.0
    %1331 = vmatprep.subr.mxu0 0.0
    %1332 = vmatpush1.msra.mxu0 0.0
    %1333 = vmatprep.mubr.f32.mxu0 0.0
    %1334 = vmatmul.mubr.f32.gmra.mrb[0].mxu0 %v1267
    %v1335 = vpop.f32.mrb[0].mxu0
    %v1336 = vadd.f32 %v1263, %v1335
    %v1337 = vpop.f32.mrb[0].mxu0
    %1338 = vdwg.mxu0
    %1339 = vmatprep.subr.mxu0 0.0
    %1340 = vmatpush1.msra.mxu0 %v1255
    %1341 = vmatprep.subr.mxu0 0.0
    %1342 = vmatpush1.msra.mxu0 %v1256
    %1343 = vmatprep.subr.mxu0 0.0
    %1344 = vmatpush1.msra.mxu0 %v1257
    %1345 = vmatprep.subr.mxu0 0.0
    %1346 = vmatpush1.msra.mxu0 0.0
    %1347 = vmatprep.subr.mxu0 0.0
    %1348 = vmatpush1.msra.mxu0 0.0
    %1349 = vmatprep.subr.mxu0 0.0
    %1350 = vmatpush1.msra.mxu0 0.0
    %1351 = vmatprep.subr.mxu0 0.0
    %1352 = vmatpush1.msra.mxu0 0.0
    %1353 = vmatprep.subr.mxu0 0.0
    %1354 = vmatpush1.msra.mxu0 0.0
    %1355 = vmatprep.subr.mxu0 0.0
    %1356 = vmatpush1.msra.mxu0 0.0
    %1357 = vmatprep.subr.mxu0 0.0
    %1358 = vmatpush1.msra.mxu0 0.0
    %1359 = vmatprep.subr.mxu0 0.0
    %1360 = vmatpush1.msra.mxu0 0.0
    %1361 = vmatprep.subr.mxu0 0.0
    %1362 = vmatpush1.msra.mxu0 0.0
    %1363 = vmatprep.subr.mxu0 0.0
    %1364 = vmatpush1.msra.mxu0 0.0
    %1365 = vmatprep.subr.mxu0 0.0
    %1366 = vmatpush1.msra.mxu0 0.0
    %1367 = vmatprep.subr.mxu0 0.0
    %1368 = vmatpush1.msra.mxu0 0.0
    %1369 = vmatprep.subr.mxu0 0.0
    %1370 = vmatpush1.msra.mxu0 0.0
    %1371 = vmatprep.subr.mxu0 0.0
    %1372 = vmatpush1.msra.mxu0 0.0
    %1373 = vmatprep.subr.mxu0 0.0
    %1374 = vmatpush1.msra.mxu0 0.0
    %1375 = vmatprep.subr.mxu0 0.0
    %1376 = vmatpush1.msra.mxu0 0.0
    %1377 = vmatprep.subr.mxu0 0.0
    %1378 = vmatpush1.msra.mxu0 0.0
    %1379 = vmatprep.subr.mxu0 0.0
    %1380 = vmatpush1.msra.mxu0 0.0
    %1381 = vmatprep.subr.mxu0 0.0
    %1382 = vmatpush1.msra.mxu0 0.0
    %1383 = vmatprep.subr.mxu0 0.0
    %1384 = vmatpush1.msra.mxu0 0.0
    %1385 = vmatprep.subr.mxu0 0.0
    %1386 = vmatpush1.msra.mxu0 0.0
    %1387 = vmatprep.subr.mxu0 0.0
    %1388 = vmatpush1.msra.mxu0 0.0
    %1389 = vmatprep.subr.mxu0 0.0
    %1390 = vmatpush1.msra.mxu0 0.0
    %1391 = vmatprep.subr.mxu0 0.0
    %1392 = vmatpush1.msra.mxu0 0.0
    %1393 = vmatprep.subr.mxu0 0.0
    %1394 = vmatpush1.msra.mxu0 0.0
    %1395 = vmatprep.subr.mxu0 0.0
    %1396 = vmatpush1.msra.mxu0 0.0
    %1397 = vmatprep.subr.mxu0 0.0
    %1398 = vmatpush1.msra.mxu0 0.0
    %1399 = vmatprep.subr.mxu0 0.0
    %1400 = vmatpush1.msra.mxu0 0.0
    %1401 = vmatprep.subr.mxu0 0.0
    %1402 = vmatpush1.msra.mxu0 0.0
    %1403 = vmatprep.mubr.f32.mxu0 0.0
    %1404 = vmatmul.mubr.f32.gmra.mrb[0].mxu0 %v1267
    %v1405 = vpop.f32.mrb[0].mxu0
    %v1406 = vadd.f32 %v1263, %v1405
    %v1407 = vpop.f32.mrb[0].mxu0
    %1408 = vdwg.mxu0
    %vm1409 = vcmask 523264
    %1410 = vst.msk [vmem:[#allocation2] sm:$0xff] %vm1409, %v1336
    %1411 = vst.msk [vmem:[#allocation2 + $0x8] sm:$0xff] %vm1409, %v1406
    // Predicated region
    $region34: #{tpu_custom_call.1} parent=1 // pred_check
      _
    $region35: #{tpu_custom_call.1} parent=1 // pred_check_branch
      %1413 = sbr.rel (0) target = $region37
    $region36: #{tpu_custom_call.1} parent=1 // pred_region
      %s1415 = ssub.s32 256, 256
      %1416 = vsyncadd [#allocation3], %s1415
      %s1417 = sshll.u32 [#allocation2], 4
      %s1418 = int_to_ptr.vmem [resolvable:$true] %s1417
      %1423 = dma.vmem_to_hbm [thread:$0]  %s1418, 256, %s8, [#allocation3], 128, 128, 8
    $region37: #{tpu_custom_call.1} parent=1 // pred_fallthru
      _
    // Predicated region
    $region38: #{tpu_custom_call.1} parent=1 // pred_check
      _
    $region39: #{tpu_custom_call.1} parent=1 // pred_check_branch
      %1425 = sbr.rel (0) target = $region41
    $region40: #{tpu_custom_call.1} parent=1 // pred_region
      %1426 = dma.done [#allocation3], 256
    $region41: #{tpu_custom_call.1} parent=1 // pred_fallthru
      _
    %1427 = vsyncpa [#allocation3], 1

</llo_original>
